<compile_context>
chip_gen: v5e
topology: v5e:2x2
jax: 0.10.0
libtpu: 0.0.40
codegen_flags: <defaults>
</compile_context>

<pallas_src>
import functools

import jax
import jax.numpy as jnp
from jax.experimental import pallas as pl
from jax.experimental.pallas import tpu as pltpu

_TARGET_BLOCK_ELEMS = 512 * 1024       # ~2 MiB per f32 input block (v5e-safe)
_MIN_PALLAS_ELEMS = 256 * 1024         # below this, XLA's fused reduce wins
_VMEM_LIMIT_BYTES = 32 * 1024 * 1024   # safe on v5e/v6e (128 MiB) and v7x (64 MiB)


def _round_down(x: int, m: int) -> int:
    return (x // m) * m


def _num_partitions() -> int:
    """2 partial sums on v7x (2 TensorCores/chip), 1 on v5e/v6e (1 TC)."""
    try:
        kind = jax.devices()[0].device_kind.lower()
    except Exception:
        return 1
    return 2 if ("v7" in kind or "7x" in kind) else 1


def _kl_partial_sum_kernel(lvp_ref, lpr_ref, out_ref, acc_ref, *,
                           rows, tr, tiles_per_part, need_mask):
    """Accumulate per-(sublane, lane) partial sums of (lvp - lpr) for one partition."""
    t = pl.program_id(1)

    @pl.when(t == 0)
    def _init():
        acc_ref[...] = jnp.zeros_like(acc_ref)

    # Cast to f32 inside the kernel: HBM traffic stays at native input width.
    diff = lvp_ref[...].astype(jnp.float32) - lpr_ref[...].astype(jnp.float32)

    if need_mask:
        # Zero rows past the end of the real data: the genuine partial last
        # tile and any clamped overrun tiles of the second partition.
        row0 = (pl.program_id(0) * tiles_per_part + t) * tr
        row_ids = row0 + jax.lax.broadcasted_iota(jnp.int32, diff.shape, 0)
        diff = jnp.where(row_ids < rows, diff, 0.0)

    # Sublane-grouped partial sums: (tr, c) -> (tr//8, 8, c) is a layout no-op
    # (splits whole (8, c) vreg-rows), so the axis-0 reduce is pure VALU adds
    # into the wide (8, c) accumulator; no per-tile cross-lane XLU work.
    c = diff.shape[1]
    acc_ref[...] += jnp.sum(diff.reshape(tr // 8, 8, c), axis=0)

    @pl.when(t == pl.num_programs(1) - 1)
    def _flush():
        out_ref[...] = acc_ref[...]


def _kl_div_pallas(lvp_flat: jax.Array, lpr_flat: jax.Array) -> jax.Array:
    n = lvp_flat.shape[0]

    # Widest lane width (multiple of 128) that divides n -> the 2-D view is a
    # free bitcast reshape, no re-materialization of the inputs.
    if n % 512 == 0:
        c = 512
    elif n % 256 == 0:
        c = 256
    elif n % 128 == 0:
        c = 128
    else:
        c = 512  # ragged: the < c leftover elements are summed in plain JAX

    rows = n // c
    main = rows * c
    tail = n - main
    assert rows >= 8, "Pallas path expects at least 8 full lane-rows"

    if tail == 0:
        lvp2 = lvp_flat.reshape(rows, c)
        lpr2 = lpr_flat.reshape(rows, c)
        tail_sum = None
    else:
        # Aligned-prefix view; the tiny (< c element) tail is reduced in JAX.
        lvp2 = jax.lax.slice(lvp_flat, (0,), (main,)).reshape(rows, c)
        lpr2 = jax.lax.slice(lpr_flat, (0,), (main,)).reshape(rows, c)
        tail_sum = jnp.sum(
            jax.lax.slice(lvp_flat, (main,), (n,)).astype(jnp.float32)
            - jax.lax.slice(lpr_flat, (main,), (n,)).astype(jnp.float32))

    num_parts = _num_partitions()
    tr = max(8, min(_round_down(_TARGET_BLOCK_ELEMS // c, 8), _round_down(rows, 8)))
    total_tiles = -(-rows // tr)
    tiles_per_part = -(-total_tiles // num_parts)
    covered_rows = num_parts * tiles_per_part * tr
    need_mask = covered_rows != rows            # partial / overrun tiles exist
    need_clamp = num_parts * tiles_per_part > total_tiles

    def idx_map(p, t):
        i = p * tiles_per_part + t
        if need_clamp:
            # Overrun tiles of the last partition re-read the last real block;
            # the in-kernel row mask zeroes their contribution.
            i = jnp.minimum(i, total_tiles - 1)
        return (i, 0)

    kernel = functools.partial(_kl_partial_sum_kernel, rows=rows, tr=tr,
                               tiles_per_part=tiles_per_part, need_mask=need_mask)

    in_bytes = main * (jnp.dtype(lvp2.dtype).itemsize
                       + jnp.dtype(lpr2.dtype).itemsize)
    out_bytes = num_parts * 8 * c * 4
    cost = pl.CostEstimate(flops=2 * main, transcendentals=0,
                           bytes_accessed=in_bytes + out_bytes)

    out = pl.pallas_call(
        kernel,
        out_shape=jax.ShapeDtypeStruct((num_parts * 8, c), jnp.float32),
        grid=(num_parts, tiles_per_part),
        in_specs=[pl.BlockSpec((tr, c), idx_map),
                  pl.BlockSpec((tr, c), idx_map)],
        out_specs=pl.BlockSpec((8, c), lambda p, t: (p, 0)),
        scratch_shapes=[pltpu.VMEM((8, c), jnp.float32)],
        # TODO(synk): on v7x, if "parallel" does not shard the partition axis
        # across the 2 TensorCores, switch it to pltpu.CORE_PARALLEL.
        compiler_params=pltpu.CompilerParams(
            dimension_semantics=("parallel", "arbitrary"),
            vmem_limit_bytes=_VMEM_LIMIT_BYTES),
        cost_estimate=cost,
    )(lvp2, lpr2)

    total = jnp.sum(out)
    if tail_sum is not None:
        total = total + tail_sum
    return total.reshape(1)


def kl_div(lvposterior: jax.Array, lprior: jax.Array) -> jax.Array:
    """Pallas/JAX equivalent of KLDiv.forward(): sum(lvposterior - lprior), (1,) f32."""
    lvp = jnp.ravel(lvposterior)
    lpr = jnp.ravel(lprior)
    assert lvp.shape == lpr.shape
    if lvp.shape[0] < _MIN_PALLAS_ELEMS:
        # Small gathers (e.g. one precomputed scalar per bayesian module, or
        # modest per-parameter term counts): XLA's fused cast+sub+reduce is
        # already at roofline; a Pallas launch would be pure overhead.
        return jnp.sum(lvp.astype(jnp.float32) - lpr.astype(jnp.float32)).reshape(1)
    return _kl_div_pallas(lvp, lpr)


if __name__ == "__main__":
    key = jax.random.PRNGKey(0)

    # Synthetic Bayesian model: each bayesian module contributes per-parameter
    # log variational posterior / log prior terms; KLDiv accumulates
    # sum(lvposterior - lprior) over all of them (associativity-equivalent to
    # the per-module scalar accumulation in the torch module).
    module_param_shapes = [(256, 512), (512, 256), (128, 512), (64, 512)]
    keys = jax.random.split(key, 2 * len(module_param_shapes) + 4)
    lvp_parts, lpr_parts = [], []
    for i, shp in enumerate(module_param_shapes):
        lvp_parts.append(jax.random.normal(keys[2 * i], shp, jnp.float32).ravel())
        lpr_parts.append(jax.random.normal(keys[2 * i + 1], shp, jnp.float32).ravel())
    lvposterior = jnp.concatenate(lvp_parts)   # 360448 terms, multiple of 512
    lprior = jnp.concatenate(lpr_parts)

    # 1) Large aligned f32 case: zero-copy bitcast reshape -> Pallas kernel.
    kl = kl_div(lvposterior, lprior)
    jax.block_until_ready(kl)
    ref = jnp.sum(lvposterior - lprior).reshape(1)
    assert kl.shape == (1,) and kl.dtype == jnp.float32
    assert jnp.allclose(kl, ref, rtol=1e-3, atol=0.5), (kl, ref)

    # 2) Ragged length (not a multiple of 128): exercises in-kernel row mask +
    #    sub-row tail summed in the wrapper.
    n_ragged = 300_003
    lvp_r = jax.random.normal(keys[-4], (n_ragged,), jnp.float32)
    lpr_r = jax.random.normal(keys[-3], (n_ragged,), jnp.float32)
    kl_r = kl_div(lvp_r, lpr_r)
    jax.block_until_ready(kl_r)
    ref_r = jnp.sum(lvp_r - lpr_r).reshape(1)
    assert jnp.allclose(kl_r, ref_r, rtol=1e-3, atol=0.5), (kl_r, ref_r)

    # 3) bf16 inputs: HBM traffic at native width, cast to f32 inside the kernel.
    kl_bf16 = kl_div(lvposterior.astype(jnp.bfloat16), lprior.astype(jnp.bfloat16))
    jax.block_until_ready(kl_bf16)
    ref_bf16 = jnp.sum(lvposterior.astype(jnp.bfloat16).astype(jnp.float32)
                       - lprior.astype(jnp.bfloat16).astype(jnp.float32)).reshape(1)
    assert jnp.allclose(kl_bf16, ref_bf16, rtol=1e-3, atol=0.5), (kl_bf16, ref_bf16)

    # 4) Small path (8 bayesian modules, one precomputed scalar each): pure JAX.
    lvp_small = jax.random.normal(keys[-2], (8,), jnp.float32)
    lpr_small = jax.random.normal(keys[-1], (8,), jnp.float32)
    kl_small = kl_div(lvp_small, lpr_small)
    jax.block_until_ready(kl_small)
    ref_small = jnp.sum(lvp_small - lpr_small).reshape(1)
    assert jnp.allclose(kl_small, ref_small, rtol=1e-5, atol=1e-5)

    print("KERNEL_OK")
</pallas_src>

<mosaic_0001>
module attributes {stable_mosaic.version = 11 : i64} {
  func.func @_kl_partial_sum_kernel(%arg0: i32, %arg1: i32, %arg2: memref<704x512xf32, #tpu.memory_space<vmem>>, %arg3: memref<704x512xf32, #tpu.memory_space<vmem>>, %arg4: memref<8x512xf32, #tpu.memory_space<vmem>>, %arg5: memref<8x512xf32, #tpu.memory_space<vmem>>) attributes {dimension_semantics = [#tpu.dimension_semantics<parallel>, #tpu.dimension_semantics<arbitrary>], iteration_bounds = array<i64: 1, 1>, scalar_prefetch = 0 : i64, scratch_operands = 1 : i64, tpu.core_type = #tpu.core_type<tc>, window_params = [{transform_indices = @transform_0, window_bounds = array<i64: 704, 512>}, {transform_indices = @transform_1, window_bounds = array<i64: 704, 512>}, {transform_indices = @transform_2, window_bounds = array<i64: 8, 512>}]} {
    %c0_i32 = arith.constant 0 : i32
    %0 = arith.cmpi eq, %arg1, %c0_i32 : i32
    %1 = arith.extui %0 : i1 to i32
    %c0_i32_0 = arith.constant 0 : i32
    %2 = arith.cmpi ne, %1, %c0_i32_0 : i32
    scf.if %2 {
      %cst_10 = arith.constant 0.000000e+00 : f32
      %14 = vector.broadcast %cst_10 : f32 to vector<8x512xf32>
      %c0_11 = arith.constant 0 : index
      %c0_12 = arith.constant 0 : index
      %15 = vector.load %arg5[%c0_11, %c0_12] : memref<8x512xf32, #tpu.memory_space<vmem>>, vector<8x512xf32>
      tpu.vector_store %arg5[%c0_11, %c0_12], %14 {strides = array<i32>} : memref<8x512xf32, #tpu.memory_space<vmem>>, vector<8x512xf32>,
    } else {
    }
    %c0 = arith.constant 0 : index
    %c0_1 = arith.constant 0 : index
    %3 = vector.load %arg2[%c0, %c0_1] : memref<704x512xf32, #tpu.memory_space<vmem>>, vector<704x512xf32>
    %c0_2 = arith.constant 0 : index
    %c0_3 = arith.constant 0 : index
    %4 = vector.load %arg3[%c0_2, %c0_3] : memref<704x512xf32, #tpu.memory_space<vmem>>, vector<704x512xf32>
    %5 = arith.subf %3, %4 : vector<704x512xf32>
    %c0_4 = arith.constant 0 : index
    %c0_5 = arith.constant 0 : index
    %6 = vector.load %arg5[%c0_4, %c0_5] : memref<8x512xf32, #tpu.memory_space<vmem>>, vector<8x512xf32>
    %7 = vector.shape_cast %5 : vector<704x512xf32> to vector<88x8x512xf32>
    %cst = arith.constant dense<0.000000e+00> : vector<8x512xf32>
    %8 = vector.multi_reduction <add>, %7, %cst [0] : vector<88x8x512xf32> to vector<8x512xf32>
    %9 = arith.addf %6, %8 : vector<8x512xf32>
    %c0_6 = arith.constant 0 : index
    %c0_7 = arith.constant 0 : index
    %10 = vector.load %arg5[%c0_6, %c0_7] : memref<8x512xf32, #tpu.memory_space<vmem>>, vector<8x512xf32>
    tpu.vector_store %arg5[%c0_6, %c0_7], %9 {strides = array<i32>} : memref<8x512xf32, #tpu.memory_space<vmem>>, vector<8x512xf32>,
    %c0_i32_8 = arith.constant 0 : i32
    %11 = arith.cmpi eq, %arg1, %c0_i32_8 : i32
    %12 = arith.extui %11 : i1 to i32
    %c0_i32_9 = arith.constant 0 : i32
    %13 = arith.cmpi ne, %12, %c0_i32_9 : i32
    scf.if %13 {
      %c0_10 = arith.constant 0 : index
      %c0_11 = arith.constant 0 : index
      %14 = vector.load %arg5[%c0_10, %c0_11] : memref<8x512xf32, #tpu.memory_space<vmem>>, vector<8x512xf32>
      %c0_12 = arith.constant 0 : index
      %c0_13 = arith.constant 0 : index
      %15 = vector.load %arg4[%c0_12, %c0_13] : memref<8x512xf32, #tpu.memory_space<vmem>>, vector<8x512xf32>
      tpu.vector_store %arg4[%c0_12, %c0_13], %14 {strides = array<i32>} : memref<8x512xf32, #tpu.memory_space<vmem>>, vector<8x512xf32>,
    } else {
    }
    return
  }
  func.func @transform_0(%arg0: i32, %arg1: i32) -> (i32, i32) {
    %c1_i32 = arith.constant 1 : i32
    %0 = arith.muli %arg0, %c1_i32 : i32
    %1 = arith.addi %0, %arg1 : i32
    %c0_i32 = arith.constant 0 : i32
    %c0_i32_0 = arith.constant 0 : i32
    return %1, %c0_i32 : i32, i32
  }
  func.func @transform_1(%arg0: i32, %arg1: i32) -> (i32, i32) {
    %c1_i32 = arith.constant 1 : i32
    %0 = arith.muli %arg0, %c1_i32 : i32
    %1 = arith.addi %0, %arg1 : i32
    %c0_i32 = arith.constant 0 : i32
    %c0_i32_0 = arith.constant 0 : i32
    return %1, %c0_i32 : i32, i32
  }
  func.func @transform_2(%arg0: i32, %arg1: i32) -> (i32, i32) {
    %c0_i32 = arith.constant 0 : i32
    %c0_i32_0 = arith.constant 0 : i32
    return %arg0, %c0_i32 : i32, i32
  }
}

</mosaic_0001>

<llo_original>
// kernel: tpu_custom_call.1
$region0: #{tpu_custom_call.1}
  #allocation0 [shape = 'u32[]', space=smem, size = 0x4, offset = 0x4, fixed_abs, tag = 'smem constant byte address 0x4 - core index']
  #allocation1 [shape = 'u32[72,128]{1,0:T(1,128)}', space=vmem, size = 0x9000, scoped, tag = 'internal scratch']
  #allocation2 [shape = 'f32[8,512]{1,0:T(8,128)}', space=vmem, size = 0x4000, scoped, tag = 'scratch operand']
  %s0 = inlined_call_operand.hbm [shape: f32[704,512], index: 0, kind: input, shape index: {}]
  %s1 = inlined_call_operand.hbm [shape: f32[704,512], index: 1, kind: input, shape index: {}]
  %s2 = inlined_call_operand.hbm [shape: f32[8,512], index: 2, kind: output, shape index: {}]
  %s3 = sld [smem:[#allocation0]]
  $region34: #{tpu_custom_call.1} parent=0
    _
  %s5 = ssub.s32 1, %s3
  %s6 = scalar_select 0, %s5, %s3
  $region1: #{tpu_custom_call.1} parent=0
    #allocation3 [shape = 'u8[1441792]{0}', space=vmem, size = 0x160000, scoped, tag = 'input window, operand 0, single buffered']
    #allocation4 [shape = 's32[1]{0}', space=sflag, size = 0x4, scoped, tag = 'scoped memory for tpu_custom_call.1']
    #allocation5 [shape = 's32[1]{0}', space=sflag, size = 0x4, scoped, tag = 'scoped memory for tpu_custom_call.1']
    #allocation6 [shape = 'u8[1441792]{0}', space=vmem, size = 0x160000, scoped, tag = 'input window, operand 1, single buffered']
    #allocation7 [shape = 's32[1]{0}', space=sflag, size = 0x4, scoped, tag = 'scoped memory for tpu_custom_call.1']
    #allocation8 [shape = 'u8[16384]{0}', space=vmem, size = 0x4000, scoped, tag = 'output window, operand 0, single buffered']
    %7 = vsyncpa [#allocation4], 0
    %8 = vsyncpa [#allocation7], 0
    %9 = vsyncpa [#allocation5], 0
    // Predicated region
    $region2: #{tpu_custom_call.1} parent=1 // pred_check
      _
    $region3: #{tpu_custom_call.1} parent=1 // pred_check_branch
      %11 = sbr.rel (0) target = $region5
    $region4: #{tpu_custom_call.1} parent=1 // pred_region
      %s12 = sadd.s32 0, 0
      %s13 = smul.u32 88, %s12
      %15 = vsyncadd [#allocation4], 0
      %s16 = smul.addr %s13, 4
      %s17 = smul.addr %s16, 8
      %s18 = scalar_lea.hbm %s0, %s17
      %s19 = sshll.u32 %s18, 4
      %s20 = int_to_ptr.hbm [resolvable:$true] %s19
      %s21 = sshll.u32 [#allocation3], 4
      %s22 = int_to_ptr.vmem [resolvable:$true] %s21
      %27 = dma.hbm_to_vmem [thread:$0]  %s20, 45056, %s22, [#allocation4], 512, 512, 32
    $region5: #{tpu_custom_call.1} parent=1 // pred_fallthru
      _
    // Predicated region
    $region6: #{tpu_custom_call.1} parent=1 // pred_check
      _
    $region7: #{tpu_custom_call.1} parent=1 // pred_check_branch
      %29 = sbr.rel (0) target = $region9
    $region8: #{tpu_custom_call.1} parent=1 // pred_region
      %s30 = sadd.s32 0, 0
      %s31 = smul.u32 88, %s30
      %33 = vsyncadd [#allocation7], 0
      %s34 = smul.addr %s31, 4
      %s35 = smul.addr %s34, 8
      %s36 = scalar_lea.hbm %s1, %s35
      %s37 = sshll.u32 %s36, 4
      %s38 = int_to_ptr.hbm [resolvable:$true] %s37
      %s39 = sshll.u32 [#allocation6], 4
      %s40 = int_to_ptr.vmem [resolvable:$true] %s39
      %45 = dma.hbm_to_vmem [thread:$0]  %s38, 45056, %s40, [#allocation7], 512, 512, 32
    $region9: #{tpu_custom_call.1} parent=1 // pred_fallthru
      _
    // Predicated region
    $region10: #{tpu_custom_call.1} parent=1 // pred_check
      _
    $region11: #{tpu_custom_call.1} parent=1 // pred_check_branch
      %47 = sbr.rel (0) target = $region13
    $region12: #{tpu_custom_call.1} parent=1 // pred_region
      %49 = dma.done [#allocation4], 45056
    $region13: #{tpu_custom_call.1} parent=1 // pred_fallthru
      _
    // Predicated region
    $region14: #{tpu_custom_call.1} parent=1 // pred_check
      _
    $region15: #{tpu_custom_call.1} parent=1 // pred_check_branch
      %51 = sbr.rel (0) target = $region17
    $region16: #{tpu_custom_call.1} parent=1 // pred_region
      %53 = dma.done [#allocation7], 45056
    $region17: #{tpu_custom_call.1} parent=1 // pred_fallthru
      _
    %s54 = sadd.s32 0, 0
    %s55 = smul.u32 88, %s54
    %s56 = sadd.s32 0, 0
    %s57 = smul.u32 88, %s56
    %p58 = scmp.eq.s32.totalorder 0, 0
    // Predicated region
    $region18: #{tpu_custom_call.1} parent=1 // pred_check
      %p59 = pneg %p58
    $region19: #{tpu_custom_call.1} parent=1 // pred_check_branch
      %61 = sbr.rel (%p59) target = $region21
    $region20: #{tpu_custom_call.1} parent=1 // pred_region
      %62 = vst [vmem:[#allocation2] sm:$0xff] 0.0
      %63 = vst [vmem:[#allocation2 + $0x8] sm:$0xff] 0.0
      %64 = vst [vmem:[#allocation2 + $0x10] sm:$0xff] 0.0
      %65 = vst [vmem:[#allocation2 + $0x18] sm:$0xff] 0.0
    $region21: #{tpu_custom_call.1} parent=1 // pred_fallthru
      _
    %v66 = vld [vmem:[#allocation3] sm:$0xff]
    %v67 = vld [vmem:[#allocation3 + $0x8] sm:$0xff]
    %v68 = vld [vmem:[#allocation3 + $0x10] sm:$0xff]
    %v69 = vld [vmem:[#allocation3 + $0x18] sm:$0xff]
    %v70 = vld [vmem:[#allocation3 + $0x20] sm:$0xff]
    %v71 = vld [vmem:[#allocation3 + $0x28] sm:$0xff]
    %v72 = vld [vmem:[#allocation3 + $0x30] sm:$0xff]
    %v73 = vld [vmem:[#allocation3 + $0x38] sm:$0xff]
    %v74 = vld [vmem:[#allocation3 + $0x40] sm:$0xff]
    %v75 = vld [vmem:[#allocation3 + $0x48] sm:$0xff]
    %v76 = vld [vmem:[#allocation3 + $0x50] sm:$0xff]
    %v77 = vld [vmem:[#allocation3 + $0x58] sm:$0xff]
    %v78 = vld [vmem:[#allocation3 + $0x60] sm:$0xff]
    %v79 = vld [vmem:[#allocation3 + $0x68] sm:$0xff]
    %v80 = vld [vmem:[#allocation3 + $0x70] sm:$0xff]
    %v81 = vld [vmem:[#allocation3 + $0x78] sm:$0xff]
    %v82 = vld [vmem:[#allocation3 + $0x80] sm:$0xff]
    %v83 = vld [vmem:[#allocation3 + $0x88] sm:$0xff]
    %v84 = vld [vmem:[#allocation3 + $0x90] sm:$0xff]
    %v85 = vld [vmem:[#allocation3 + $0x98] sm:$0xff]
    %v86 = vld [vmem:[#allocation3 + $0xa0] sm:$0xff]
    %v87 = vld [vmem:[#allocation3 + $0xa8] sm:$0xff]
    %v88 = vld [vmem:[#allocation3 + $0xb0] sm:$0xff]
    %v89 = vld [vmem:[#allocation3 + $0xb8] sm:$0xff]
    %v90 = vld [vmem:[#allocation3 + $0xc0] sm:$0xff]
    %v91 = vld [vmem:[#allocation3 + $0xc8] sm:$0xff]
    %v92 = vld [vmem:[#allocation3 + $0xd0] sm:$0xff]
    %v93 = vld [vmem:[#allocation3 + $0xd8] sm:$0xff]
    %v94 = vld [vmem:[#allocation3 + $0xe0] sm:$0xff]
    %v95 = vld [vmem:[#allocation3 + $0xe8] sm:$0xff]
    %v96 = vld [vmem:[#allocation3 + $0xf0] sm:$0xff]
    %v97 = vld [vmem:[#allocation3 + $0xf8] sm:$0xff]
    %v98 = vld [vmem:[#allocation3 + $0x100] sm:$0xff]
    %v99 = vld [vmem:[#allocation3 + $0x108] sm:$0xff]
    %v100 = vld [vmem:[#allocation3 + $0x110] sm:$0xff]
    %v101 = vld [vmem:[#allocation3 + $0x118] sm:$0xff]
    %v102 = vld [vmem:[#allocation3 + $0x120] sm:$0xff]
    %v103 = vld [vmem:[#allocation3 + $0x128] sm:$0xff]
    %v104 = vld [vmem:[#allocation3 + $0x130] sm:$0xff]
    %v105 = vld [vmem:[#allocation3 + $0x138] sm:$0xff]
    %v106 = vld [vmem:[#allocation3 + $0x140] sm:$0xff]
    %v107 = vld [vmem:[#allocation3 + $0x148] sm:$0xff]
    %v108 = vld [vmem:[#allocation3 + $0x150] sm:$0xff]
    %v109 = vld [vmem:[#allocation3 + $0x158] sm:$0xff]
    %v110 = vld [vmem:[#allocation3 + $0x160] sm:$0xff]
    %v111 = vld [vmem:[#allocation3 + $0x168] sm:$0xff]
    %v112 = vld [vmem:[#allocation3 + $0x170] sm:$0xff]
    %v113 = vld [vmem:[#allocation3 + $0x178] sm:$0xff]
    %v114 = vld [vmem:[#allocation3 + $0x180] sm:$0xff]
    %v115 = vld [vmem:[#allocation3 + $0x188] sm:$0xff]
    %v116 = vld [vmem:[#allocation3 + $0x190] sm:$0xff]
    %v117 = vld [vmem:[#allocation3 + $0x198] sm:$0xff]
    %v118 = vld [vmem:[#allocation3 + $0x1a0] sm:$0xff]
    %v119 = vld [vmem:[#allocation3 + $0x1a8] sm:$0xff]
    %v120 = vld [vmem:[#allocation3 + $0x1b0] sm:$0xff]
    %v121 = vld [vmem:[#allocation3 + $0x1b8] sm:$0xff]
    %v122 = vld [vmem:[#allocation3 + $0x1c0] sm:$0xff]
    %v123 = vld [vmem:[#allocation3 + $0x1c8] sm:$0xff]
    %v124 = vld [vmem:[#allocation3 + $0x1d0] sm:$0xff]
    %v125 = vld [vmem:[#allocation3 + $0x1d8] sm:$0xff]
    %v126 = vld [vmem:[#allocation3 + $0x1e0] sm:$0xff]
    %v127 = vld [vmem:[#allocation3 + $0x1e8] sm:$0xff]
    %v128 = vld [vmem:[#allocation3 + $0x1f0] sm:$0xff]
    %v129 = vld [vmem:[#allocation3 + $0x1f8] sm:$0xff]
    %v130 = vld [vmem:[#allocation3 + $0x200] sm:$0xff]
    %v131 = vld [vmem:[#allocation3 + $0x208] sm:$0xff]
    %v132 = vld [vmem:[#allocation3 + $0x210] sm:$0xff]
    %v133 = vld [vmem:[#allocation3 + $0x218] sm:$0xff]
    %v134 = vld [vmem:[#allocation3 + $0x220] sm:$0xff]
    %v135 = vld [vmem:[#allocation3 + $0x228] sm:$0xff]
    %v136 = vld [vmem:[#allocation3 + $0x230] sm:$0xff]
    %v137 = vld [vmem:[#allocation3 + $0x238] sm:$0xff]
    %v138 = vld [vmem:[#allocation3 + $0x240] sm:$0xff]
    %v139 = vld [vmem:[#allocation3 + $0x248] sm:$0xff]
    %v140 = vld [vmem:[#allocation3 + $0x250] sm:$0xff]
    %v141 = vld [vmem:[#allocation3 + $0x258] sm:$0xff]
    %v142 = vld [vmem:[#allocation3 + $0x260] sm:$0xff]
    %v143 = vld [vmem:[#allocation3 + $0x268] sm:$0xff]
    %v144 = vld [vmem:[#allocation3 + $0x270] sm:$0xff]
    %v145 = vld [vmem:[#allocation3 + $0x278] sm:$0xff]
    %v146 = vld [vmem:[#allocation3 + $0x280] sm:$0xff]
    %v147 = vld [vmem:[#allocation3 + $0x288] sm:$0xff]
    %v148 = vld [vmem:[#allocation3 + $0x290] sm:$0xff]
    %v149 = vld [vmem:[#allocation3 + $0x298] sm:$0xff]
    %v150 = vld [vmem:[#allocation3 + $0x2a0] sm:$0xff]
    %v151 = vld [vmem:[#allocation3 + $0x2a8] sm:$0xff]
    %v152 = vld [vmem:[#allocation3 + $0x2b0] sm:$0xff]
    %v153 = vld [vmem:[#allocation3 + $0x2b8] sm:$0xff]
    %v154 = vld [vmem:[#allocation3 + $0x2c0] sm:$0xff]
    %v155 = vld [vmem:[#allocation3 + $0x2c8] sm:$0xff]
    %v156 = vld [vmem:[#allocation3 + $0x2d0] sm:$0xff]
    %v157 = vld [vmem:[#allocation3 + $0x2d8] sm:$0xff]
    %v158 = vld [vmem:[#allocation3 + $0x2e0] sm:$0xff]
    %v159 = vld [vmem:[#allocation3 + $0x2e8] sm:$0xff]
    %v160 = vld [vmem:[#allocation3 + $0x2f0] sm:$0xff]
    %v161 = vld [vmem:[#allocation3 + $0x2f8] sm:$0xff]
    %v162 = vld [vmem:[#allocation3 + $0x300] sm:$0xff]
    %v163 = vld [vmem:[#allocation3 + $0x308] sm:$0xff]
    %v164 = vld [vmem:[#allocation3 + $0x310] sm:$0xff]
    %v165 = vld [vmem:[#allocation3 + $0x318] sm:$0xff]
    %v166 = vld [vmem:[#allocation3 + $0x320] sm:$0xff]
    %v167 = vld [vmem:[#allocation3 + $0x328] sm:$0xff]
    %v168 = vld [vmem:[#allocation3 + $0x330] sm:$0xff]
    %v169 = vld [vmem:[#allocation3 + $0x338] sm:$0xff]
    %v170 = vld [vmem:[#allocation3 + $0x340] sm:$0xff]
    %v171 = vld [vmem:[#allocation3 + $0x348] sm:$0xff]
    %v172 = vld [vmem:[#allocation3 + $0x350] sm:$0xff]
    %v173 = vld [vmem:[#allocation3 + $0x358] sm:$0xff]
    %v174 = vld [vmem:[#allocation3 + $0x360] sm:$0xff]
    %v175 = vld [vmem:[#allocation3 + $0x368] sm:$0xff]
    %v176 = vld [vmem:[#allocation3 + $0x370] sm:$0xff]
    %v177 = vld [vmem:[#allocation3 + $0x378] sm:$0xff]
    %v178 = vld [vmem:[#allocation3 + $0x380] sm:$0xff]
    %v179 = vld [vmem:[#allocation3 + $0x388] sm:$0xff]
    %v180 = vld [vmem:[#allocation3 + $0x390] sm:$0xff]
    %v181 = vld [vmem:[#allocation3 + $0x398] sm:$0xff]
    %v182 = vld [vmem:[#allocation3 + $0x3a0] sm:$0xff]
    %v183 = vld [vmem:[#allocation3 + $0x3a8] sm:$0xff]
    %v184 = vld [vmem:[#allocation3 + $0x3b0] sm:$0xff]
    %v185 = vld [vmem:[#allocation3 + $0x3b8] sm:$0xff]
    %v186 = vld [vmem:[#allocation3 + $0x3c0] sm:$0xff]
    %v187 = vld [vmem:[#allocation3 + $0x3c8] sm:$0xff]
    %v188 = vld [vmem:[#allocation3 + $0x3d0] sm:$0xff]
    %v189 = vld [vmem:[#allocation3 + $0x3d8] sm:$0xff]
    %v190 = vld [vmem:[#allocation3 + $0x3e0] sm:$0xff]
    %v191 = vld [vmem:[#allocation3 + $0x3e8] sm:$0xff]
    %v192 = vld [vmem:[#allocation3 + $0x3f0] sm:$0xff]
    %v193 = vld [vmem:[#allocation3 + $0x3f8] sm:$0xff]
    %v194 = vld [vmem:[#allocation3 + $0x400] sm:$0xff]
    %v195 = vld [vmem:[#allocation3 + $0x408] sm:$0xff]
    %v196 = vld [vmem:[#allocation3 + $0x410] sm:$0xff]
    %v197 = vld [vmem:[#allocation3 + $0x418] sm:$0xff]
    %v198 = vld [vmem:[#allocation3 + $0x420] sm:$0xff]
    %v199 = vld [vmem:[#allocation3 + $0x428] sm:$0xff]
    %v200 = vld [vmem:[#allocation3 + $0x430] sm:$0xff]
    %v201 = vld [vmem:[#allocation3 + $0x438] sm:$0xff]
    %v202 = vld [vmem:[#allocation3 + $0x440] sm:$0xff]
    %v203 = vld [vmem:[#allocation3 + $0x448] sm:$0xff]
    %v204 = vld [vmem:[#allocation3 + $0x450] sm:$0xff]
    %v205 = vld [vmem:[#allocation3 + $0x458] sm:$0xff]
    %v206 = vld [vmem:[#allocation3 + $0x460] sm:$0xff]
    %v207 = vld [vmem:[#allocation3 + $0x468] sm:$0xff]
    %v208 = vld [vmem:[#allocation3 + $0x470] sm:$0xff]
    %v209 = vld [vmem:[#allocation3 + $0x478] sm:$0xff]
    %v210 = vld [vmem:[#allocation3 + $0x480] sm:$0xff]
    %v211 = vld [vmem:[#allocation3 + $0x488] sm:$0xff]
    %v212 = vld [vmem:[#allocation3 + $0x490] sm:$0xff]
    %v213 = vld [vmem:[#allocation3 + $0x498] sm:$0xff]
    %v214 = vld [vmem:[#allocation3 + $0x4a0] sm:$0xff]
    %v215 = vld [vmem:[#allocation3 + $0x4a8] sm:$0xff]
    %v216 = vld [vmem:[#allocation3 + $0x4b0] sm:$0xff]
    %v217 = vld [vmem:[#allocation3 + $0x4b8] sm:$0xff]
    %v218 = vld [vmem:[#allocation3 + $0x4c0] sm:$0xff]
    %v219 = vld [vmem:[#allocation3 + $0x4c8] sm:$0xff]
    %v220 = vld [vmem:[#allocation3 + $0x4d0] sm:$0xff]
    %v221 = vld [vmem:[#allocation3 + $0x4d8] sm:$0xff]
    %v222 = vld [vmem:[#allocation3 + $0x4e0] sm:$0xff]
    %v223 = vld [vmem:[#allocation3 + $0x4e8] sm:$0xff]
    %v224 = vld [vmem:[#allocation3 + $0x4f0] sm:$0xff]
    %v225 = vld [vmem:[#allocation3 + $0x4f8] sm:$0xff]
    %v226 = vld [vmem:[#allocation3 + $0x500] sm:$0xff]
    %v227 = vld [vmem:[#allocation3 + $0x508] sm:$0xff]
    %v228 = vld [vmem:[#allocation3 + $0x510] sm:$0xff]
    %v229 = vld [vmem:[#allocation3 + $0x518] sm:$0xff]
    %v230 = vld [vmem:[#allocation3 + $0x520] sm:$0xff]
    %v231 = vld [vmem:[#allocation3 + $0x528] sm:$0xff]
    %v232 = vld [vmem:[#allocation3 + $0x530] sm:$0xff]
    %v233 = vld [vmem:[#allocation3 + $0x538] sm:$0xff]
    %v234 = vld [vmem:[#allocation3 + $0x540] sm:$0xff]
    %v235 = vld [vmem:[#allocation3 + $0x548] sm:$0xff]
    %v236 = vld [vmem:[#allocation3 + $0x550] sm:$0xff]
    %v237 = vld [vmem:[#allocation3 + $0x558] sm:$0xff]
    %v238 = vld [vmem:[#allocation3 + $0x560] sm:$0xff]
    %v239 = vld [vmem:[#allocation3 + $0x568] sm:$0xff]
    %v240 = vld [vmem:[#allocation3 + $0x570] sm:$0xff]
    %v241 = vld [vmem:[#allocation3 + $0x578] sm:$0xff]
    %v242 = vld [vmem:[#allocation3 + $0x580] sm:$0xff]
    %v243 = vld [vmem:[#allocation3 + $0x588] sm:$0xff]
    %v244 = vld [vmem:[#allocation3 + $0x590] sm:$0xff]
    %v245 = vld [vmem:[#allocation3 + $0x598] sm:$0xff]
    %v246 = vld [vmem:[#allocation3 + $0x5a0] sm:$0xff]
    %v247 = vld [vmem:[#allocation3 + $0x5a8] sm:$0xff]
    %v248 = vld [vmem:[#allocation3 + $0x5b0] sm:$0xff]
    %v249 = vld [vmem:[#allocation3 + $0x5b8] sm:$0xff]
    %v250 = vld [vmem:[#allocation3 + $0x5c0] sm:$0xff]
    %v251 = vld [vmem:[#allocation3 + $0x5c8] sm:$0xff]
    %v252 = vld [vmem:[#allocation3 + $0x5d0] sm:$0xff]
    %v253 = vld [vmem:[#allocation3 + $0x5d8] sm:$0xff]
    %v254 = vld [vmem:[#allocation3 + $0x5e0] sm:$0xff]
    %v255 = vld [vmem:[#allocation3 + $0x5e8] sm:$0xff]
    %v256 = vld [vmem:[#allocation3 + $0x5f0] sm:$0xff]
    %v257 = vld [vmem:[#allocation3 + $0x5f8] sm:$0xff]
    %v258 = vld [vmem:[#allocation3 + $0x600] sm:$0xff]
    %v259 = vld [vmem:[#allocation3 + $0x608] sm:$0xff]
    %v260 = vld [vmem:[#allocation3 + $0x610] sm:$0xff]
    %v261 = vld [vmem:[#allocation3 + $0x618] sm:$0xff]
    %v262 = vld [vmem:[#allocation3 + $0x620] sm:$0xff]
    %v263 = vld [vmem:[#allocation3 + $0x628] sm:$0xff]
    %v264 = vld [vmem:[#allocation3 + $0x630] sm:$0xff]
    %v265 = vld [vmem:[#allocation3 + $0x638] sm:$0xff]
    %v266 = vld [vmem:[#allocation3 + $0x640] sm:$0xff]
    %v267 = vld [vmem:[#allocation3 + $0x648] sm:$0xff]
    %v268 = vld [vmem:[#allocation3 + $0x650] sm:$0xff]
    %v269 = vld [vmem:[#allocation3 + $0x658] sm:$0xff]
    %v270 = vld [vmem:[#allocation3 + $0x660] sm:$0xff]
    %v271 = vld [vmem:[#allocation3 + $0x668] sm:$0xff]
    %v272 = vld [vmem:[#allocation3 + $0x670] sm:$0xff]
    %v273 = vld [vmem:[#allocation3 + $0x678] sm:$0xff]
    %v274 = vld [vmem:[#allocation3 + $0x680] sm:$0xff]
    %v275 = vld [vmem:[#allocation3 + $0x688] sm:$0xff]
    %v276 = vld [vmem:[#allocation3 + $0x690] sm:$0xff]
    %v277 = vld [vmem:[#allocation3 + $0x698] sm:$0xff]
    %v278 = vld [vmem:[#allocation3 + $0x6a0] sm:$0xff]
    %v279 = vld [vmem:[#allocation3 + $0x6a8] sm:$0xff]
    %v280 = vld [vmem:[#allocation3 + $0x6b0] sm:$0xff]
    %v281 = vld [vmem:[#allocation3 + $0x6b8] sm:$0xff]
    %v282 = vld [vmem:[#allocation3 + $0x6c0] sm:$0xff]
    %v283 = vld [vmem:[#allocation3 + $0x6c8] sm:$0xff]
    %v284 = vld [vmem:[#allocation3 + $0x6d0] sm:$0xff]
    %v285 = vld [vmem:[#allocation3 + $0x6d8] sm:$0xff]
    %v286 = vld [vmem:[#allocation3 + $0x6e0] sm:$0xff]
    %v287 = vld [vmem:[#allocation3 + $0x6e8] sm:$0xff]
    %v288 = vld [vmem:[#allocation3 + $0x6f0] sm:$0xff]
    %v289 = vld [vmem:[#allocation3 + $0x6f8] sm:$0xff]
    %v290 = vld [vmem:[#allocation3 + $0x700] sm:$0xff]
    %v291 = vld [vmem:[#allocation3 + $0x708] sm:$0xff]
    %v292 = vld [vmem:[#allocation3 + $0x710] sm:$0xff]
    %v293 = vld [vmem:[#allocation3 + $0x718] sm:$0xff]
    %v294 = vld [vmem:[#allocation3 + $0x720] sm:$0xff]
    %v295 = vld [vmem:[#allocation3 + $0x728] sm:$0xff]
    %v296 = vld [vmem:[#allocation3 + $0x730] sm:$0xff]
    %v297 = vld [vmem:[#allocation3 + $0x738] sm:$0xff]
    %v298 = vld [vmem:[#allocation3 + $0x740] sm:$0xff]
    %v299 = vld [vmem:[#allocation3 + $0x748] sm:$0xff]
    %v300 = vld [vmem:[#allocation3 + $0x750] sm:$0xff]
    %v301 = vld [vmem:[#allocation3 + $0x758] sm:$0xff]
    %v302 = vld [vmem:[#allocation3 + $0x760] sm:$0xff]
    %v303 = vld [vmem:[#allocation3 + $0x768] sm:$0xff]
    %v304 = vld [vmem:[#allocation3 + $0x770] sm:$0xff]
    %v305 = vld [vmem:[#allocation3 + $0x778] sm:$0xff]
    %v306 = vld [vmem:[#allocation3 + $0x780] sm:$0xff]
    %v307 = vld [vmem:[#allocation3 + $0x788] sm:$0xff]
    %v308 = vld [vmem:[#allocation3 + $0x790] sm:$0xff]
    %v309 = vld [vmem:[#allocation3 + $0x798] sm:$0xff]
    %v310 = vld [vmem:[#allocation3 + $0x7a0] sm:$0xff]
    %v311 = vld [vmem:[#allocation3 + $0x7a8] sm:$0xff]
    %v312 = vld [vmem:[#allocation3 + $0x7b0] sm:$0xff]
    %v313 = vld [vmem:[#allocation3 + $0x7b8] sm:$0xff]
    %v314 = vld [vmem:[#allocation3 + $0x7c0] sm:$0xff]
    %v315 = vld [vmem:[#allocation3 + $0x7c8] sm:$0xff]
    %v316 = vld [vmem:[#allocation3 + $0x7d0] sm:$0xff]
    %v317 = vld [vmem:[#allocation3 + $0x7d8] sm:$0xff]
    %v318 = vld [vmem:[#allocation3 + $0x7e0] sm:$0xff]
    %v319 = vld [vmem:[#allocation3 + $0x7e8] sm:$0xff]
    %v320 = vld [vmem:[#allocation3 + $0x7f0] sm:$0xff]
    %v321 = vld [vmem:[#allocation3 + $0x7f8] sm:$0xff]
    %v322 = vld [vmem:[#allocation3 + $0x800] sm:$0xff]
    %v323 = vld [vmem:[#allocation3 + $0x808] sm:$0xff]
    %v324 = vld [vmem:[#allocation3 + $0x810] sm:$0xff]
    %v325 = vld [vmem:[#allocation3 + $0x818] sm:$0xff]
    %v326 = vld [vmem:[#allocation3 + $0x820] sm:$0xff]
    %v327 = vld [vmem:[#allocation3 + $0x828] sm:$0xff]
    %v328 = vld [vmem:[#allocation3 + $0x830] sm:$0xff]
    %v329 = vld [vmem:[#allocation3 + $0x838] sm:$0xff]
    %v330 = vld [vmem:[#allocation3 + $0x840] sm:$0xff]
    %v331 = vld [vmem:[#allocation3 + $0x848] sm:$0xff]
    %v332 = vld [vmem:[#allocation3 + $0x850] sm:$0xff]
    %v333 = vld [vmem:[#allocation3 + $0x858] sm:$0xff]
    %v334 = vld [vmem:[#allocation3 + $0x860] sm:$0xff]
    %v335 = vld [vmem:[#allocation3 + $0x868] sm:$0xff]
    %v336 = vld [vmem:[#allocation3 + $0x870] sm:$0xff]
    %v337 = vld [vmem:[#allocation3 + $0x878] sm:$0xff]
    %v338 = vld [vmem:[#allocation3 + $0x880] sm:$0xff]
    %v339 = vld [vmem:[#allocation3 + $0x888] sm:$0xff]
    %v340 = vld [vmem:[#allocation3 + $0x890] sm:$0xff]
    %v341 = vld [vmem:[#allocation3 + $0x898] sm:$0xff]
    %v342 = vld [vmem:[#allocation3 + $0x8a0] sm:$0xff]
    %v343 = vld [vmem:[#allocation3 + $0x8a8] sm:$0xff]
    %v344 = vld [vmem:[#allocation3 + $0x8b0] sm:$0xff]
    %v345 = vld [vmem:[#allocation3 + $0x8b8] sm:$0xff]
    %v346 = vld [vmem:[#allocation3 + $0x8c0] sm:$0xff]
    %v347 = vld [vmem:[#allocation3 + $0x8c8] sm:$0xff]
    %v348 = vld [vmem:[#allocation3 + $0x8d0] sm:$0xff]
    %v349 = vld [vmem:[#allocation3 + $0x8d8] sm:$0xff]
    %v350 = vld [vmem:[#allocation3 + $0x8e0] sm:$0xff]
    %v351 = vld [vmem:[#allocation3 + $0x8e8] sm:$0xff]
    %v352 = vld [vmem:[#allocation3 + $0x8f0] sm:$0xff]
    %v353 = vld [vmem:[#allocation3 + $0x8f8] sm:$0xff]
    %v354 = vld [vmem:[#allocation3 + $0x900] sm:$0xff]
    %v355 = vld [vmem:[#allocation3 + $0x908] sm:$0xff]
    %v356 = vld [vmem:[#allocation3 + $0x910] sm:$0xff]
    %v357 = vld [vmem:[#allocation3 + $0x918] sm:$0xff]
    %v358 = vld [vmem:[#allocation3 + $0x920] sm:$0xff]
    %v359 = vld [vmem:[#allocation3 + $0x928] sm:$0xff]
    %v360 = vld [vmem:[#allocation3 + $0x930] sm:$0xff]
    %v361 = vld [vmem:[#allocation3 + $0x938] sm:$0xff]
    %v362 = vld [vmem:[#allocation3 + $0x940] sm:$0xff]
    %v363 = vld [vmem:[#allocation3 + $0x948] sm:$0xff]
    %v364 = vld [vmem:[#allocation3 + $0x950] sm:$0xff]
    %v365 = vld [vmem:[#allocation3 + $0x958] sm:$0xff]
    %v366 = vld [vmem:[#allocation3 + $0x960] sm:$0xff]
    %v367 = vld [vmem:[#allocation3 + $0x968] sm:$0xff]
    %v368 = vld [vmem:[#allocation3 + $0x970] sm:$0xff]
    %v369 = vld [vmem:[#allocation3 + $0x978] sm:$0xff]
    %v370 = vld [vmem:[#allocation3 + $0x980] sm:$0xff]
    %v371 = vld [vmem:[#allocation3 + $0x988] sm:$0xff]
    %v372 = vld [vmem:[#allocation3 + $0x990] sm:$0xff]
    %v373 = vld [vmem:[#allocation3 + $0x998] sm:$0xff]
    %v374 = vld [vmem:[#allocation3 + $0x9a0] sm:$0xff]
    %v375 = vld [vmem:[#allocation3 + $0x9a8] sm:$0xff]
    %v376 = vld [vmem:[#allocation3 + $0x9b0] sm:$0xff]
    %v377 = vld [vmem:[#allocation3 + $0x9b8] sm:$0xff]
    %v378 = vld [vmem:[#allocation3 + $0x9c0] sm:$0xff]
    %v379 = vld [vmem:[#allocation3 + $0x9c8] sm:$0xff]
    %v380 = vld [vmem:[#allocation3 + $0x9d0] sm:$0xff]
    %v381 = vld [vmem:[#allocation3 + $0x9d8] sm:$0xff]
    %v382 = vld [vmem:[#allocation3 + $0x9e0] sm:$0xff]
    %v383 = vld [vmem:[#allocation3 + $0x9e8] sm:$0xff]
    %v384 = vld [vmem:[#allocation3 + $0x9f0] sm:$0xff]
    %v385 = vld [vmem:[#allocation3 + $0x9f8] sm:$0xff]
    %v386 = vld [vmem:[#allocation3 + $0xa00] sm:$0xff]
    %v387 = vld [vmem:[#allocation3 + $0xa08] sm:$0xff]
    %v388 = vld [vmem:[#allocation3 + $0xa10] sm:$0xff]
    %v389 = vld [vmem:[#allocation3 + $0xa18] sm:$0xff]
    %v390 = vld [vmem:[#allocation3 + $0xa20] sm:$0xff]
    %v391 = vld [vmem:[#allocation3 + $0xa28] sm:$0xff]
    %v392 = vld [vmem:[#allocation3 + $0xa30] sm:$0xff]
    %v393 = vld [vmem:[#allocation3 + $0xa38] sm:$0xff]
    %v394 = vld [vmem:[#allocation3 + $0xa40] sm:$0xff]
    %v395 = vld [vmem:[#allocation3 + $0xa48] sm:$0xff]
    %v396 = vld [vmem:[#allocation3 + $0xa50] sm:$0xff]
    %v397 = vld [vmem:[#allocation3 + $0xa58] sm:$0xff]
    %v398 = vld [vmem:[#allocation3 + $0xa60] sm:$0xff]
    %v399 = vld [vmem:[#allocation3 + $0xa68] sm:$0xff]
    %v400 = vld [vmem:[#allocation3 + $0xa70] sm:$0xff]
    %v401 = vld [vmem:[#allocation3 + $0xa78] sm:$0xff]
    %v402 = vld [vmem:[#allocation3 + $0xa80] sm:$0xff]
    %v403 = vld [vmem:[#allocation3 + $0xa88] sm:$0xff]
    %v404 = vld [vmem:[#allocation3 + $0xa90] sm:$0xff]
    %v405 = vld [vmem:[#allocation3 + $0xa98] sm:$0xff]
    %v406 = vld [vmem:[#allocation3 + $0xaa0] sm:$0xff]
    %v407 = vld [vmem:[#allocation3 + $0xaa8] sm:$0xff]
    %v408 = vld [vmem:[#allocation3 + $0xab0] sm:$0xff]
    %v409 = vld [vmem:[#allocation3 + $0xab8] sm:$0xff]
    %v410 = vld [vmem:[#allocation3 + $0xac0] sm:$0xff]
    %v411 = vld [vmem:[#allocation3 + $0xac8] sm:$0xff]
    %v412 = vld [vmem:[#allocation3 + $0xad0] sm:$0xff]
    %v413 = vld [vmem:[#allocation3 + $0xad8] sm:$0xff]
    %v414 = vld [vmem:[#allocation3 + $0xae0] sm:$0xff]
    %v415 = vld [vmem:[#allocation3 + $0xae8] sm:$0xff]
    %v416 = vld [vmem:[#allocation3 + $0xaf0] sm:$0xff]
    %v417 = vld [vmem:[#allocation3 + $0xaf8] sm:$0xff]
    %v418 = vld [vmem:[#allocation6] sm:$0xff]
    %v419 = vld [vmem:[#allocation6 + $0x8] sm:$0xff]
    %v420 = vld [vmem:[#allocation6 + $0x10] sm:$0xff]
    %v421 = vld [vmem:[#allocation6 + $0x18] sm:$0xff]
    %v422 = vld [vmem:[#allocation6 + $0x20] sm:$0xff]
    %v423 = vld [vmem:[#allocation6 + $0x28] sm:$0xff]
    %v424 = vld [vmem:[#allocation6 + $0x30] sm:$0xff]
    %v425 = vld [vmem:[#allocation6 + $0x38] sm:$0xff]
    %v426 = vld [vmem:[#allocation6 + $0x40] sm:$0xff]
    %v427 = vld [vmem:[#allocation6 + $0x48] sm:$0xff]
    %v428 = vld [vmem:[#allocation6 + $0x50] sm:$0xff]
    %v429 = vld [vmem:[#allocation6 + $0x58] sm:$0xff]
    %v430 = vld [vmem:[#allocation6 + $0x60] sm:$0xff]
    %v431 = vld [vmem:[#allocation6 + $0x68] sm:$0xff]
    %v432 = vld [vmem:[#allocation6 + $0x70] sm:$0xff]
    %v433 = vld [vmem:[#allocation6 + $0x78] sm:$0xff]
    %v434 = vld [vmem:[#allocation6 + $0x80] sm:$0xff]
    %v435 = vld [vmem:[#allocation6 + $0x88] sm:$0xff]
    %v436 = vld [vmem:[#allocation6 + $0x90] sm:$0xff]
    %v437 = vld [vmem:[#allocation6 + $0x98] sm:$0xff]
    %v438 = vld [vmem:[#allocation6 + $0xa0] sm:$0xff]
    %v439 = vld [vmem:[#allocation6 + $0xa8] sm:$0xff]
    %v440 = vld [vmem:[#allocation6 + $0xb0] sm:$0xff]
    %v441 = vld [vmem:[#allocation6 + $0xb8] sm:$0xff]
    %v442 = vld [vmem:[#allocation6 + $0xc0] sm:$0xff]
    %v443 = vld [vmem:[#allocation6 + $0xc8] sm:$0xff]
    %v444 = vld [vmem:[#allocation6 + $0xd0] sm:$0xff]
    %v445 = vld [vmem:[#allocation6 + $0xd8] sm:$0xff]
    %v446 = vld [vmem:[#allocation6 + $0xe0] sm:$0xff]
    %v447 = vld [vmem:[#allocation6 + $0xe8] sm:$0xff]
    %v448 = vld [vmem:[#allocation6 + $0xf0] sm:$0xff]
    %v449 = vld [vmem:[#allocation6 + $0xf8] sm:$0xff]
    %v450 = vld [vmem:[#allocation6 + $0x100] sm:$0xff]
    %v451 = vld [vmem:[#allocation6 + $0x108] sm:$0xff]
    %v452 = vld [vmem:[#allocation6 + $0x110] sm:$0xff]
    %v453 = vld [vmem:[#allocation6 + $0x118] sm:$0xff]
    %v454 = vld [vmem:[#allocation6 + $0x120] sm:$0xff]
    %v455 = vld [vmem:[#allocation6 + $0x128] sm:$0xff]
    %v456 = vld [vmem:[#allocation6 + $0x130] sm:$0xff]
    %v457 = vld [vmem:[#allocation6 + $0x138] sm:$0xff]
    %v458 = vld [vmem:[#allocation6 + $0x140] sm:$0xff]
    %v459 = vld [vmem:[#allocation6 + $0x148] sm:$0xff]
    %v460 = vld [vmem:[#allocation6 + $0x150] sm:$0xff]
    %v461 = vld [vmem:[#allocation6 + $0x158] sm:$0xff]
    %v462 = vld [vmem:[#allocation6 + $0x160] sm:$0xff]
    %v463 = vld [vmem:[#allocation6 + $0x168] sm:$0xff]
    %v464 = vld [vmem:[#allocation6 + $0x170] sm:$0xff]
    %v465 = vld [vmem:[#allocation6 + $0x178] sm:$0xff]
    %v466 = vld [vmem:[#allocation6 + $0x180] sm:$0xff]
    %v467 = vld [vmem:[#allocation6 + $0x188] sm:$0xff]
    %v468 = vld [vmem:[#allocation6 + $0x190] sm:$0xff]
    %v469 = vld [vmem:[#allocation6 + $0x198] sm:$0xff]
    %v470 = vld [vmem:[#allocation6 + $0x1a0] sm:$0xff]
    %v471 = vld [vmem:[#allocation6 + $0x1a8] sm:$0xff]
    %v472 = vld [vmem:[#allocation6 + $0x1b0] sm:$0xff]
    %v473 = vld [vmem:[#allocation6 + $0x1b8] sm:$0xff]
    %v474 = vld [vmem:[#allocation6 + $0x1c0] sm:$0xff]
    %v475 = vld [vmem:[#allocation6 + $0x1c8] sm:$0xff]
    %v476 = vld [vmem:[#allocation6 + $0x1d0] sm:$0xff]
    %v477 = vld [vmem:[#allocation6 + $0x1d8] sm:$0xff]
    %v478 = vld [vmem:[#allocation6 + $0x1e0] sm:$0xff]
    %v479 = vld [vmem:[#allocation6 + $0x1e8] sm:$0xff]
    %v480 = vld [vmem:[#allocation6 + $0x1f0] sm:$0xff]
    %v481 = vld [vmem:[#allocation6 + $0x1f8] sm:$0xff]
    %v482 = vld [vmem:[#allocation6 + $0x200] sm:$0xff]
    %v483 = vld [vmem:[#allocation6 + $0x208] sm:$0xff]
    %v484 = vld [vmem:[#allocation6 + $0x210] sm:$0xff]
    %v485 = vld [vmem:[#allocation6 + $0x218] sm:$0xff]
    %v486 = vld [vmem:[#allocation6 + $0x220] sm:$0xff]
    %v487 = vld [vmem:[#allocation6 + $0x228] sm:$0xff]
    %v488 = vld [vmem:[#allocation6 + $0x230] sm:$0xff]
    %v489 = vld [vmem:[#allocation6 + $0x238] sm:$0xff]
    %v490 = vld [vmem:[#allocation6 + $0x240] sm:$0xff]
    %v491 = vld [vmem:[#allocation6 + $0x248] sm:$0xff]
    %v492 = vld [vmem:[#allocation6 + $0x250] sm:$0xff]
    %v493 = vld [vmem:[#allocation6 + $0x258] sm:$0xff]
    %v494 = vld [vmem:[#allocation6 + $0x260] sm:$0xff]
    %v495 = vld [vmem:[#allocation6 + $0x268] sm:$0xff]
    %v496 = vld [vmem:[#allocation6 + $0x270] sm:$0xff]
    %v497 = vld [vmem:[#allocation6 + $0x278] sm:$0xff]
    %v498 = vld [vmem:[#allocation6 + $0x280] sm:$0xff]
    %v499 = vld [vmem:[#allocation6 + $0x288] sm:$0xff]
    %v500 = vld [vmem:[#allocation6 + $0x290] sm:$0xff]
    %v501 = vld [vmem:[#allocation6 + $0x298] sm:$0xff]
    %v502 = vld [vmem:[#allocation6 + $0x2a0] sm:$0xff]
    %v503 = vld [vmem:[#allocation6 + $0x2a8] sm:$0xff]
    %v504 = vld [vmem:[#allocation6 + $0x2b0] sm:$0xff]
    %v505 = vld [vmem:[#allocation6 + $0x2b8] sm:$0xff]
    %v506 = vld [vmem:[#allocation6 + $0x2c0] sm:$0xff]
    %v507 = vld [vmem:[#allocation6 + $0x2c8] sm:$0xff]
    %v508 = vld [vmem:[#allocation6 + $0x2d0] sm:$0xff]
    %v509 = vld [vmem:[#allocation6 + $0x2d8] sm:$0xff]
    %v510 = vld [vmem:[#allocation6 + $0x2e0] sm:$0xff]
    %v511 = vld [vmem:[#allocation6 + $0x2e8] sm:$0xff]
    %v512 = vld [vmem:[#allocation6 + $0x2f0] sm:$0xff]
    %v513 = vld [vmem:[#allocation6 + $0x2f8] sm:$0xff]
    %v514 = vld [vmem:[#allocation6 + $0x300] sm:$0xff]
    %v515 = vld [vmem:[#allocation6 + $0x308] sm:$0xff]
    %v516 = vld [vmem:[#allocation6 + $0x310] sm:$0xff]
    %v517 = vld [vmem:[#allocation6 + $0x318] sm:$0xff]
    %v518 = vld [vmem:[#allocation6 + $0x320] sm:$0xff]
    %v519 = vld [vmem:[#allocation6 + $0x328] sm:$0xff]
    %v520 = vld [vmem:[#allocation6 + $0x330] sm:$0xff]
    %v521 = vld [vmem:[#allocation6 + $0x338] sm:$0xff]
    %v522 = vld [vmem:[#allocation6 + $0x340] sm:$0xff]
    %v523 = vld [vmem:[#allocation6 + $0x348] sm:$0xff]
    %v524 = vld [vmem:[#allocation6 + $0x350] sm:$0xff]
    %v525 = vld [vmem:[#allocation6 + $0x358] sm:$0xff]
    %v526 = vld [vmem:[#allocation6 + $0x360] sm:$0xff]
    %v527 = vld [vmem:[#allocation6 + $0x368] sm:$0xff]
    %v528 = vld [vmem:[#allocation6 + $0x370] sm:$0xff]
    %v529 = vld [vmem:[#allocation6 + $0x378] sm:$0xff]
    %v530 = vld [vmem:[#allocation6 + $0x380] sm:$0xff]
    %v531 = vld [vmem:[#allocation6 + $0x388] sm:$0xff]
    %v532 = vld [vmem:[#allocation6 + $0x390] sm:$0xff]
    %v533 = vld [vmem:[#allocation6 + $0x398] sm:$0xff]
    %v534 = vld [vmem:[#allocation6 + $0x3a0] sm:$0xff]
    %v535 = vld [vmem:[#allocation6 + $0x3a8] sm:$0xff]
    %v536 = vld [vmem:[#allocation6 + $0x3b0] sm:$0xff]
    %v537 = vld [vmem:[#allocation6 + $0x3b8] sm:$0xff]
    %v538 = vld [vmem:[#allocation6 + $0x3c0] sm:$0xff]
    %v539 = vld [vmem:[#allocation6 + $0x3c8] sm:$0xff]
    %v540 = vld [vmem:[#allocation6 + $0x3d0] sm:$0xff]
    %v541 = vld [vmem:[#allocation6 + $0x3d8] sm:$0xff]
    %v542 = vld [vmem:[#allocation6 + $0x3e0] sm:$0xff]
    %v543 = vld [vmem:[#allocation6 + $0x3e8] sm:$0xff]
    %v544 = vld [vmem:[#allocation6 + $0x3f0] sm:$0xff]
    %v545 = vld [vmem:[#allocation6 + $0x3f8] sm:$0xff]
    %v546 = vld [vmem:[#allocation6 + $0x400] sm:$0xff]
    %v547 = vld [vmem:[#allocation6 + $0x408] sm:$0xff]
    %v548 = vld [vmem:[#allocation6 + $0x410] sm:$0xff]
    %v549 = vld [vmem:[#allocation6 + $0x418] sm:$0xff]
    %v550 = vld [vmem:[#allocation6 + $0x420] sm:$0xff]
    %v551 = vld [vmem:[#allocation6 + $0x428] sm:$0xff]
    %v552 = vld [vmem:[#allocation6 + $0x430] sm:$0xff]
    %v553 = vld [vmem:[#allocation6 + $0x438] sm:$0xff]
    %v554 = vld [vmem:[#allocation6 + $0x440] sm:$0xff]
    %v555 = vld [vmem:[#allocation6 + $0x448] sm:$0xff]
    %v556 = vld [vmem:[#allocation6 + $0x450] sm:$0xff]
    %v557 = vld [vmem:[#allocation6 + $0x458] sm:$0xff]
    %v558 = vld [vmem:[#allocation6 + $0x460] sm:$0xff]
    %v559 = vld [vmem:[#allocation6 + $0x468] sm:$0xff]
    %v560 = vld [vmem:[#allocation6 + $0x470] sm:$0xff]
    %v561 = vld [vmem:[#allocation6 + $0x478] sm:$0xff]
    %v562 = vld [vmem:[#allocation6 + $0x480] sm:$0xff]
    %v563 = vld [vmem:[#allocation6 + $0x488] sm:$0xff]
    %v564 = vld [vmem:[#allocation6 + $0x490] sm:$0xff]
    %v565 = vld [vmem:[#allocation6 + $0x498] sm:$0xff]
    %v566 = vld [vmem:[#allocation6 + $0x4a0] sm:$0xff]
    %v567 = vld [vmem:[#allocation6 + $0x4a8] sm:$0xff]
    %v568 = vld [vmem:[#allocation6 + $0x4b0] sm:$0xff]
    %v569 = vld [vmem:[#allocation6 + $0x4b8] sm:$0xff]
    %v570 = vld [vmem:[#allocation6 + $0x4c0] sm:$0xff]
    %v571 = vld [vmem:[#allocation6 + $0x4c8] sm:$0xff]
    %v572 = vld [vmem:[#allocation6 + $0x4d0] sm:$0xff]
    %v573 = vld [vmem:[#allocation6 + $0x4d8] sm:$0xff]
    %v574 = vld [vmem:[#allocation6 + $0x4e0] sm:$0xff]
    %v575 = vld [vmem:[#allocation6 + $0x4e8] sm:$0xff]
    %v576 = vld [vmem:[#allocation6 + $0x4f0] sm:$0xff]
    %v577 = vld [vmem:[#allocation6 + $0x4f8] sm:$0xff]
    %v578 = vld [vmem:[#allocation6 + $0x500] sm:$0xff]
    %v579 = vld [vmem:[#allocation6 + $0x508] sm:$0xff]
    %v580 = vld [vmem:[#allocation6 + $0x510] sm:$0xff]
    %v581 = vld [vmem:[#allocation6 + $0x518] sm:$0xff]
    %v582 = vld [vmem:[#allocation6 + $0x520] sm:$0xff]
    %v583 = vld [vmem:[#allocation6 + $0x528] sm:$0xff]
    %v584 = vld [vmem:[#allocation6 + $0x530] sm:$0xff]
    %v585 = vld [vmem:[#allocation6 + $0x538] sm:$0xff]
    %v586 = vld [vmem:[#allocation6 + $0x540] sm:$0xff]
    %v587 = vld [vmem:[#allocation6 + $0x548] sm:$0xff]
    %v588 = vld [vmem:[#allocation6 + $0x550] sm:$0xff]
    %v589 = vld [vmem:[#allocation6 + $0x558] sm:$0xff]
    %v590 = vld [vmem:[#allocation6 + $0x560] sm:$0xff]
    %v591 = vld [vmem:[#allocation6 + $0x568] sm:$0xff]
    %v592 = vld [vmem:[#allocation6 + $0x570] sm:$0xff]
    %v593 = vld [vmem:[#allocation6 + $0x578] sm:$0xff]
    %v594 = vld [vmem:[#allocation6 + $0x580] sm:$0xff]
    %v595 = vld [vmem:[#allocation6 + $0x588] sm:$0xff]
    %v596 = vld [vmem:[#allocation6 + $0x590] sm:$0xff]
    %v597 = vld [vmem:[#allocation6 + $0x598] sm:$0xff]
    %v598 = vld [vmem:[#allocation6 + $0x5a0] sm:$0xff]
    %v599 = vld [vmem:[#allocation6 + $0x5a8] sm:$0xff]
    %v600 = vld [vmem:[#allocation6 + $0x5b0] sm:$0xff]
    %v601 = vld [vmem:[#allocation6 + $0x5b8] sm:$0xff]
    %v602 = vld [vmem:[#allocation6 + $0x5c0] sm:$0xff]
    %v603 = vld [vmem:[#allocation6 + $0x5c8] sm:$0xff]
    %v604 = vld [vmem:[#allocation6 + $0x5d0] sm:$0xff]
    %v605 = vld [vmem:[#allocation6 + $0x5d8] sm:$0xff]
    %v606 = vld [vmem:[#allocation6 + $0x5e0] sm:$0xff]
    %v607 = vld [vmem:[#allocation6 + $0x5e8] sm:$0xff]
    %v608 = vld [vmem:[#allocation6 + $0x5f0] sm:$0xff]
    %v609 = vld [vmem:[#allocation6 + $0x5f8] sm:$0xff]
    %v610 = vld [vmem:[#allocation6 + $0x600] sm:$0xff]
    %v611 = vld [vmem:[#allocation6 + $0x608] sm:$0xff]
    %v612 = vld [vmem:[#allocation6 + $0x610] sm:$0xff]
    %v613 = vld [vmem:[#allocation6 + $0x618] sm:$0xff]
    %v614 = vld [vmem:[#allocation6 + $0x620] sm:$0xff]
    %v615 = vld [vmem:[#allocation6 + $0x628] sm:$0xff]
    %v616 = vld [vmem:[#allocation6 + $0x630] sm:$0xff]
    %v617 = vld [vmem:[#allocation6 + $0x638] sm:$0xff]
    %v618 = vld [vmem:[#allocation6 + $0x640] sm:$0xff]
    %v619 = vld [vmem:[#allocation6 + $0x648] sm:$0xff]
    %v620 = vld [vmem:[#allocation6 + $0x650] sm:$0xff]
    %v621 = vld [vmem:[#allocation6 + $0x658] sm:$0xff]
    %v622 = vld [vmem:[#allocation6 + $0x660] sm:$0xff]
    %v623 = vld [vmem:[#allocation6 + $0x668] sm:$0xff]
    %v624 = vld [vmem:[#allocation6 + $0x670] sm:$0xff]
    %v625 = vld [vmem:[#allocation6 + $0x678] sm:$0xff]
    %v626 = vld [vmem:[#allocation6 + $0x680] sm:$0xff]
    %v627 = vld [vmem:[#allocation6 + $0x688] sm:$0xff]
    %v628 = vld [vmem:[#allocation6 + $0x690] sm:$0xff]
    %v629 = vld [vmem:[#allocation6 + $0x698] sm:$0xff]
    %v630 = vld [vmem:[#allocation6 + $0x6a0] sm:$0xff]
    %v631 = vld [vmem:[#allocation6 + $0x6a8] sm:$0xff]
    %v632 = vld [vmem:[#allocation6 + $0x6b0] sm:$0xff]
    %v633 = vld [vmem:[#allocation6 + $0x6b8] sm:$0xff]
    %v634 = vld [vmem:[#allocation6 + $0x6c0] sm:$0xff]
    %v635 = vld [vmem:[#allocation6 + $0x6c8] sm:$0xff]
    %v636 = vld [vmem:[#allocation6 + $0x6d0] sm:$0xff]
    %v637 = vld [vmem:[#allocation6 + $0x6d8] sm:$0xff]
    %v638 = vld [vmem:[#allocation6 + $0x6e0] sm:$0xff]
    %v639 = vld [vmem:[#allocation6 + $0x6e8] sm:$0xff]
    %v640 = vld [vmem:[#allocation6 + $0x6f0] sm:$0xff]
    %v641 = vld [vmem:[#allocation6 + $0x6f8] sm:$0xff]
    %v642 = vld [vmem:[#allocation6 + $0x700] sm:$0xff]
    %v643 = vld [vmem:[#allocation6 + $0x708] sm:$0xff]
    %v644 = vld [vmem:[#allocation6 + $0x710] sm:$0xff]
    %v645 = vld [vmem:[#allocation6 + $0x718] sm:$0xff]
    %v646 = vld [vmem:[#allocation6 + $0x720] sm:$0xff]
    %v647 = vld [vmem:[#allocation6 + $0x728] sm:$0xff]
    %v648 = vld [vmem:[#allocation6 + $0x730] sm:$0xff]
    %v649 = vld [vmem:[#allocation6 + $0x738] sm:$0xff]
    %v650 = vld [vmem:[#allocation6 + $0x740] sm:$0xff]
    %v651 = vld [vmem:[#allocation6 + $0x748] sm:$0xff]
    %v652 = vld [vmem:[#allocation6 + $0x750] sm:$0xff]
    %v653 = vld [vmem:[#allocation6 + $0x758] sm:$0xff]
    %v654 = vld [vmem:[#allocation6 + $0x760] sm:$0xff]
    %v655 = vld [vmem:[#allocation6 + $0x768] sm:$0xff]
    %v656 = vld [vmem:[#allocation6 + $0x770] sm:$0xff]
    %v657 = vld [vmem:[#allocation6 + $0x778] sm:$0xff]
    %v658 = vld [vmem:[#allocation6 + $0x780] sm:$0xff]
    %v659 = vld [vmem:[#allocation6 + $0x788] sm:$0xff]
    %v660 = vld [vmem:[#allocation6 + $0x790] sm:$0xff]
    %v661 = vld [vmem:[#allocation6 + $0x798] sm:$0xff]
    %v662 = vld [vmem:[#allocation6 + $0x7a0] sm:$0xff]
    %v663 = vld [vmem:[#allocation6 + $0x7a8] sm:$0xff]
    %v664 = vld [vmem:[#allocation6 + $0x7b0] sm:$0xff]
    %v665 = vld [vmem:[#allocation6 + $0x7b8] sm:$0xff]
    %v666 = vld [vmem:[#allocation6 + $0x7c0] sm:$0xff]
    %v667 = vld [vmem:[#allocation6 + $0x7c8] sm:$0xff]
    %v668 = vld [vmem:[#allocation6 + $0x7d0] sm:$0xff]
    %v669 = vld [vmem:[#allocation6 + $0x7d8] sm:$0xff]
    %v670 = vld [vmem:[#allocation6 + $0x7e0] sm:$0xff]
    %v671 = vld [vmem:[#allocation6 + $0x7e8] sm:$0xff]
    %v672 = vld [vmem:[#allocation6 + $0x7f0] sm:$0xff]
    %v673 = vld [vmem:[#allocation6 + $0x7f8] sm:$0xff]
    %v674 = vld [vmem:[#allocation6 + $0x800] sm:$0xff]
    %v675 = vld [vmem:[#allocation6 + $0x808] sm:$0xff]
    %v676 = vld [vmem:[#allocation6 + $0x810] sm:$0xff]
    %v677 = vld [vmem:[#allocation6 + $0x818] sm:$0xff]
    %v678 = vld [vmem:[#allocation6 + $0x820] sm:$0xff]
    %v679 = vld [vmem:[#allocation6 + $0x828] sm:$0xff]
    %v680 = vld [vmem:[#allocation6 + $0x830] sm:$0xff]
    %v681 = vld [vmem:[#allocation6 + $0x838] sm:$0xff]
    %v682 = vld [vmem:[#allocation6 + $0x840] sm:$0xff]
    %v683 = vld [vmem:[#allocation6 + $0x848] sm:$0xff]
    %v684 = vld [vmem:[#allocation6 + $0x850] sm:$0xff]
    %v685 = vld [vmem:[#allocation6 + $0x858] sm:$0xff]
    %v686 = vld [vmem:[#allocation6 + $0x860] sm:$0xff]
    %v687 = vld [vmem:[#allocation6 + $0x868] sm:$0xff]
    %v688 = vld [vmem:[#allocation6 + $0x870] sm:$0xff]
    %v689 = vld [vmem:[#allocation6 + $0x878] sm:$0xff]
    %v690 = vld [vmem:[#allocation6 + $0x880] sm:$0xff]
    %v691 = vld [vmem:[#allocation6 + $0x888] sm:$0xff]
    %v692 = vld [vmem:[#allocation6 + $0x890] sm:$0xff]
    %v693 = vld [vmem:[#allocation6 + $0x898] sm:$0xff]
    %v694 = vld [vmem:[#allocation6 + $0x8a0] sm:$0xff]
    %v695 = vld [vmem:[#allocation6 + $0x8a8] sm:$0xff]
    %v696 = vld [vmem:[#allocation6 + $0x8b0] sm:$0xff]
    %v697 = vld [vmem:[#allocation6 + $0x8b8] sm:$0xff]
    %v698 = vld [vmem:[#allocation6 + $0x8c0] sm:$0xff]
    %v699 = vld [vmem:[#allocation6 + $0x8c8] sm:$0xff]
    %v700 = vld [vmem:[#allocation6 + $0x8d0] sm:$0xff]
    %v701 = vld [vmem:[#allocation6 + $0x8d8] sm:$0xff]
    %v702 = vld [vmem:[#allocation6 + $0x8e0] sm:$0xff]
    %v703 = vld [vmem:[#allocation6 + $0x8e8] sm:$0xff]
    %v704 = vld [vmem:[#allocation6 + $0x8f0] sm:$0xff]
    %v705 = vld [vmem:[#allocation6 + $0x8f8] sm:$0xff]
    %v706 = vld [vmem:[#allocation6 + $0x900] sm:$0xff]
    %v707 = vld [vmem:[#allocation6 + $0x908] sm:$0xff]
    %v708 = vld [vmem:[#allocation6 + $0x910] sm:$0xff]
    %v709 = vld [vmem:[#allocation6 + $0x918] sm:$0xff]
    %v710 = vld [vmem:[#allocation6 + $0x920] sm:$0xff]
    %v711 = vld [vmem:[#allocation6 + $0x928] sm:$0xff]
    %v712 = vld [vmem:[#allocation6 + $0x930] sm:$0xff]
    %v713 = vld [vmem:[#allocation6 + $0x938] sm:$0xff]
    %v714 = vld [vmem:[#allocation6 + $0x940] sm:$0xff]
    %v715 = vld [vmem:[#allocation6 + $0x948] sm:$0xff]
    %v716 = vld [vmem:[#allocation6 + $0x950] sm:$0xff]
    %v717 = vld [vmem:[#allocation6 + $0x958] sm:$0xff]
    %v718 = vld [vmem:[#allocation6 + $0x960] sm:$0xff]
    %v719 = vld [vmem:[#allocation6 + $0x968] sm:$0xff]
    %v720 = vld [vmem:[#allocation6 + $0x970] sm:$0xff]
    %v721 = vld [vmem:[#allocation6 + $0x978] sm:$0xff]
    %v722 = vld [vmem:[#allocation6 + $0x980] sm:$0xff]
    %v723 = vld [vmem:[#allocation6 + $0x988] sm:$0xff]
    %v724 = vld [vmem:[#allocation6 + $0x990] sm:$0xff]
    %v725 = vld [vmem:[#allocation6 + $0x998] sm:$0xff]
    %v726 = vld [vmem:[#allocation6 + $0x9a0] sm:$0xff]
    %v727 = vld [vmem:[#allocation6 + $0x9a8] sm:$0xff]
    %v728 = vld [vmem:[#allocation6 + $0x9b0] sm:$0xff]
    %v729 = vld [vmem:[#allocation6 + $0x9b8] sm:$0xff]
    %v730 = vld [vmem:[#allocation6 + $0x9c0] sm:$0xff]
    %v731 = vld [vmem:[#allocation6 + $0x9c8] sm:$0xff]
    %v732 = vld [vmem:[#allocation6 + $0x9d0] sm:$0xff]
    %v733 = vld [vmem:[#allocation6 + $0x9d8] sm:$0xff]
    %v734 = vld [vmem:[#allocation6 + $0x9e0] sm:$0xff]
    %v735 = vld [vmem:[#allocation6 + $0x9e8] sm:$0xff]
    %v736 = vld [vmem:[#allocation6 + $0x9f0] sm:$0xff]
    %v737 = vld [vmem:[#allocation6 + $0x9f8] sm:$0xff]
    %v738 = vld [vmem:[#allocation6 + $0xa00] sm:$0xff]
    %v739 = vld [vmem:[#allocation6 + $0xa08] sm:$0xff]
    %v740 = vld [vmem:[#allocation6 + $0xa10] sm:$0xff]
    %v741 = vld [vmem:[#allocation6 + $0xa18] sm:$0xff]
    %v742 = vld [vmem:[#allocation6 + $0xa20] sm:$0xff]
    %v743 = vld [vmem:[#allocation6 + $0xa28] sm:$0xff]
    %v744 = vld [vmem:[#allocation6 + $0xa30] sm:$0xff]
    %v745 = vld [vmem:[#allocation6 + $0xa38] sm:$0xff]
    %v746 = vld [vmem:[#allocation6 + $0xa40] sm:$0xff]
    %v747 = vld [vmem:[#allocation6 + $0xa48] sm:$0xff]
    %v748 = vld [vmem:[#allocation6 + $0xa50] sm:$0xff]
    %v749 = vld [vmem:[#allocation6 + $0xa58] sm:$0xff]
    %v750 = vld [vmem:[#allocation6 + $0xa60] sm:$0xff]
    %v751 = vld [vmem:[#allocation6 + $0xa68] sm:$0xff]
    %v752 = vld [vmem:[#allocation6 + $0xa70] sm:$0xff]
    %v753 = vld [vmem:[#allocation6 + $0xa78] sm:$0xff]
    %v754 = vld [vmem:[#allocation6 + $0xa80] sm:$0xff]
    %v755 = vld [vmem:[#allocation6 + $0xa88] sm:$0xff]
    %v756 = vld [vmem:[#allocation6 + $0xa90] sm:$0xff]
    %v757 = vld [vmem:[#allocation6 + $0xa98] sm:$0xff]
    %v758 = vld [vmem:[#allocation6 + $0xaa0] sm:$0xff]
    %v759 = vld [vmem:[#allocation6 + $0xaa8] sm:$0xff]
    %v760 = vld [vmem:[#allocation6 + $0xab0] sm:$0xff]
    %v761 = vld [vmem:[#allocation6 + $0xab8] sm:$0xff]
    %v762 = vld [vmem:[#allocation6 + $0xac0] sm:$0xff]
    %v763 = vld [vmem:[#allocation6 + $0xac8] sm:$0xff]
    %v764 = vld [vmem:[#allocation6 + $0xad0] sm:$0xff]
    %v765 = vld [vmem:[#allocation6 + $0xad8] sm:$0xff]
    %v766 = vld [vmem:[#allocation6 + $0xae0] sm:$0xff]
    %v767 = vld [vmem:[#allocation6 + $0xae8] sm:$0xff]
    %v768 = vld [vmem:[#allocation6 + $0xaf0] sm:$0xff]
    %v769 = vld [vmem:[#allocation6 + $0xaf8] sm:$0xff]
    %v770 = vsub.f32 %v66, %v418
    %v771 = vsub.f32 %v67, %v419
    %v772 = vsub.f32 %v68, %v420
    %v773 = vsub.f32 %v69, %v421
    %v774 = vsub.f32 %v70, %v422
    %v775 = vsub.f32 %v71, %v423
    %v776 = vsub.f32 %v72, %v424
    %v777 = vsub.f32 %v73, %v425
    %v778 = vsub.f32 %v74, %v426
    %v779 = vsub.f32 %v75, %v427
    %v780 = vsub.f32 %v76, %v428
    %v781 = vsub.f32 %v77, %v429
    %v782 = vsub.f32 %v78, %v430
    %v783 = vsub.f32 %v79, %v431
    %v784 = vsub.f32 %v80, %v432
    %v785 = vsub.f32 %v81, %v433
    %v786 = vsub.f32 %v82, %v434
    %v787 = vsub.f32 %v83, %v435
    %v788 = vsub.f32 %v84, %v436
    %v789 = vsub.f32 %v85, %v437
    %v790 = vsub.f32 %v86, %v438
    %v791 = vsub.f32 %v87, %v439
    %v792 = vsub.f32 %v88, %v440
    %v793 = vsub.f32 %v89, %v441
    %v794 = vsub.f32 %v90, %v442
    %v795 = vsub.f32 %v91, %v443
    %v796 = vsub.f32 %v92, %v444
    %v797 = vsub.f32 %v93, %v445
    %v798 = vsub.f32 %v94, %v446
    %v799 = vsub.f32 %v95, %v447
    %v800 = vsub.f32 %v96, %v448
    %v801 = vsub.f32 %v97, %v449
    %v802 = vsub.f32 %v98, %v450
    %v803 = vsub.f32 %v99, %v451
    %v804 = vsub.f32 %v100, %v452
    %v805 = vsub.f32 %v101, %v453
    %v806 = vsub.f32 %v102, %v454
    %v807 = vsub.f32 %v103, %v455
    %v808 = vsub.f32 %v104, %v456
    %v809 = vsub.f32 %v105, %v457
    %v810 = vsub.f32 %v106, %v458
    %v811 = vsub.f32 %v107, %v459
    %v812 = vsub.f32 %v108, %v460
    %v813 = vsub.f32 %v109, %v461
    %v814 = vsub.f32 %v110, %v462
    %v815 = vsub.f32 %v111, %v463
    %v816 = vsub.f32 %v112, %v464
    %v817 = vsub.f32 %v113, %v465
    %v818 = vsub.f32 %v114, %v466
    %v819 = vsub.f32 %v115, %v467
    %v820 = vsub.f32 %v116, %v468
    %v821 = vsub.f32 %v117, %v469
    %v822 = vsub.f32 %v118, %v470
    %v823 = vsub.f32 %v119, %v471
    %v824 = vsub.f32 %v120, %v472
    %v825 = vsub.f32 %v121, %v473
    %v826 = vsub.f32 %v122, %v474
    %v827 = vsub.f32 %v123, %v475
    %v828 = vsub.f32 %v124, %v476
    %v829 = vsub.f32 %v125, %v477
    %v830 = vsub.f32 %v126, %v478
    %v831 = vsub.f32 %v127, %v479
    %v832 = vsub.f32 %v128, %v480
    %v833 = vsub.f32 %v129, %v481
    %v834 = vsub.f32 %v130, %v482
    %v835 = vsub.f32 %v131, %v483
    %v836 = vsub.f32 %v132, %v484
    %v837 = vsub.f32 %v133, %v485
    %v838 = vsub.f32 %v134, %v486
    %v839 = vsub.f32 %v135, %v487
    %v840 = vsub.f32 %v136, %v488
    %v841 = vsub.f32 %v137, %v489
    %v842 = vsub.f32 %v138, %v490
    %v843 = vsub.f32 %v139, %v491
    %v844 = vsub.f32 %v140, %v492
    %v845 = vsub.f32 %v141, %v493
    %v846 = vsub.f32 %v142, %v494
    %v847 = vsub.f32 %v143, %v495
    %v848 = vsub.f32 %v144, %v496
    %v849 = vsub.f32 %v145, %v497
    %v850 = vsub.f32 %v146, %v498
    %v851 = vsub.f32 %v147, %v499
    %v852 = vsub.f32 %v148, %v500
    %v853 = vsub.f32 %v149, %v501
    %v854 = vsub.f32 %v150, %v502
    %v855 = vsub.f32 %v151, %v503
    %v856 = vsub.f32 %v152, %v504
    %v857 = vsub.f32 %v153, %v505
    %v858 = vsub.f32 %v154, %v506
    %v859 = vsub.f32 %v155, %v507
    %v860 = vsub.f32 %v156, %v508
    %v861 = vsub.f32 %v157, %v509
    %v862 = vsub.f32 %v158, %v510
    %v863 = vsub.f32 %v159, %v511
    %v864 = vsub.f32 %v160, %v512
    %v865 = vsub.f32 %v161, %v513
    %v866 = vsub.f32 %v162, %v514
    %v867 = vsub.f32 %v163, %v515
    %v868 = vsub.f32 %v164, %v516
    %v869 = vsub.f32 %v165, %v517
    %v870 = vsub.f32 %v166, %v518
    %v871 = vsub.f32 %v167, %v519
    %v872 = vsub.f32 %v168, %v520
    %v873 = vsub.f32 %v169, %v521
    %v874 = vsub.f32 %v170, %v522
    %v875 = vsub.f32 %v171, %v523
    %v876 = vsub.f32 %v172, %v524
    %v877 = vsub.f32 %v173, %v525
    %v878 = vsub.f32 %v174, %v526
    %v879 = vsub.f32 %v175, %v527
    %v880 = vsub.f32 %v176, %v528
    %v881 = vsub.f32 %v177, %v529
    %v882 = vsub.f32 %v178, %v530
    %v883 = vsub.f32 %v179, %v531
    %v884 = vsub.f32 %v180, %v532
    %v885 = vsub.f32 %v181, %v533
    %v886 = vsub.f32 %v182, %v534
    %v887 = vsub.f32 %v183, %v535
    %v888 = vsub.f32 %v184, %v536
    %v889 = vsub.f32 %v185, %v537
    %v890 = vsub.f32 %v186, %v538
    %v891 = vsub.f32 %v187, %v539
    %v892 = vsub.f32 %v188, %v540
    %v893 = vsub.f32 %v189, %v541
    %v894 = vsub.f32 %v190, %v542
    %v895 = vsub.f32 %v191, %v543
    %v896 = vsub.f32 %v192, %v544
    %v897 = vsub.f32 %v193, %v545
    %v898 = vsub.f32 %v194, %v546
    %v899 = vsub.f32 %v195, %v547
    %v900 = vsub.f32 %v196, %v548
    %v901 = vsub.f32 %v197, %v549
    %v902 = vsub.f32 %v198, %v550
    %v903 = vsub.f32 %v199, %v551
    %v904 = vsub.f32 %v200, %v552
    %v905 = vsub.f32 %v201, %v553
    %v906 = vsub.f32 %v202, %v554
    %v907 = vsub.f32 %v203, %v555
    %v908 = vsub.f32 %v204, %v556
    %v909 = vsub.f32 %v205, %v557
    %v910 = vsub.f32 %v206, %v558
    %v911 = vsub.f32 %v207, %v559
    %v912 = vsub.f32 %v208, %v560
    %v913 = vsub.f32 %v209, %v561
    %v914 = vsub.f32 %v210, %v562
    %v915 = vsub.f32 %v211, %v563
    %v916 = vsub.f32 %v212, %v564
    %v917 = vsub.f32 %v213, %v565
    %v918 = vsub.f32 %v214, %v566
    %v919 = vsub.f32 %v215, %v567
    %v920 = vsub.f32 %v216, %v568
    %v921 = vsub.f32 %v217, %v569
    %v922 = vsub.f32 %v218, %v570
    %v923 = vsub.f32 %v219, %v571
    %v924 = vsub.f32 %v220, %v572
    %v925 = vsub.f32 %v221, %v573
    %v926 = vsub.f32 %v222, %v574
    %v927 = vsub.f32 %v223, %v575
    %v928 = vsub.f32 %v224, %v576
    %v929 = vsub.f32 %v225, %v577
    %v930 = vsub.f32 %v226, %v578
    %v931 = vsub.f32 %v227, %v579
    %v932 = vsub.f32 %v228, %v580
    %v933 = vsub.f32 %v229, %v581
    %v934 = vsub.f32 %v230, %v582
    %v935 = vsub.f32 %v231, %v583
    %v936 = vsub.f32 %v232, %v584
    %v937 = vsub.f32 %v233, %v585
    %v938 = vsub.f32 %v234, %v586
    %v939 = vsub.f32 %v235, %v587
    %v940 = vsub.f32 %v236, %v588
    %v941 = vsub.f32 %v237, %v589
    %v942 = vsub.f32 %v238, %v590
    %v943 = vsub.f32 %v239, %v591
    %v944 = vsub.f32 %v240, %v592
    %v945 = vsub.f32 %v241, %v593
    %v946 = vsub.f32 %v242, %v594
    %v947 = vsub.f32 %v243, %v595
    %v948 = vsub.f32 %v244, %v596
    %v949 = vsub.f32 %v245, %v597
    %v950 = vsub.f32 %v246, %v598
    %v951 = vsub.f32 %v247, %v599
    %v952 = vsub.f32 %v248, %v600
    %v953 = vsub.f32 %v249, %v601
    %v954 = vsub.f32 %v250, %v602
    %v955 = vsub.f32 %v251, %v603
    %v956 = vsub.f32 %v252, %v604
    %v957 = vsub.f32 %v253, %v605
    %v958 = vsub.f32 %v254, %v606
    %v959 = vsub.f32 %v255, %v607
    %v960 = vsub.f32 %v256, %v608
    %v961 = vsub.f32 %v257, %v609
    %v962 = vsub.f32 %v258, %v610
    %v963 = vsub.f32 %v259, %v611
    %v964 = vsub.f32 %v260, %v612
    %v965 = vsub.f32 %v261, %v613
    %v966 = vsub.f32 %v262, %v614
    %v967 = vsub.f32 %v263, %v615
    %v968 = vsub.f32 %v264, %v616
    %v969 = vsub.f32 %v265, %v617
    %v970 = vsub.f32 %v266, %v618
    %v971 = vsub.f32 %v267, %v619
    %v972 = vsub.f32 %v268, %v620
    %v973 = vsub.f32 %v269, %v621
    %v974 = vsub.f32 %v270, %v622
    %v975 = vsub.f32 %v271, %v623
    %v976 = vsub.f32 %v272, %v624
    %v977 = vsub.f32 %v273, %v625
    %v978 = vsub.f32 %v274, %v626
    %v979 = vsub.f32 %v275, %v627
    %v980 = vsub.f32 %v276, %v628
    %v981 = vsub.f32 %v277, %v629
    %v982 = vsub.f32 %v278, %v630
    %v983 = vsub.f32 %v279, %v631
    %v984 = vsub.f32 %v280, %v632
    %v985 = vsub.f32 %v281, %v633
    %v986 = vsub.f32 %v282, %v634
    %v987 = vsub.f32 %v283, %v635
    %v988 = vsub.f32 %v284, %v636
    %v989 = vsub.f32 %v285, %v637
    %v990 = vsub.f32 %v286, %v638
    %v991 = vsub.f32 %v287, %v639
    %v992 = vsub.f32 %v288, %v640
    %v993 = vsub.f32 %v289, %v641
    %v994 = vsub.f32 %v290, %v642
    %v995 = vsub.f32 %v291, %v643
    %v996 = vsub.f32 %v292, %v644
    %v997 = vsub.f32 %v293, %v645
    %v998 = vsub.f32 %v294, %v646
    %v999 = vsub.f32 %v295, %v647
    %v1000 = vsub.f32 %v296, %v648
    %v1001 = vsub.f32 %v297, %v649
    %v1002 = vsub.f32 %v298, %v650
    %v1003 = vsub.f32 %v299, %v651
    %v1004 = vsub.f32 %v300, %v652
    %v1005 = vsub.f32 %v301, %v653
    %v1006 = vsub.f32 %v302, %v654
    %v1007 = vsub.f32 %v303, %v655
    %v1008 = vsub.f32 %v304, %v656
    %v1009 = vsub.f32 %v305, %v657
    %v1010 = vsub.f32 %v306, %v658
    %v1011 = vsub.f32 %v307, %v659
    %v1012 = vsub.f32 %v308, %v660
    %v1013 = vsub.f32 %v309, %v661
    %v1014 = vsub.f32 %v310, %v662
    %v1015 = vsub.f32 %v311, %v663
    %v1016 = vsub.f32 %v312, %v664
    %v1017 = vsub.f32 %v313, %v665
    %v1018 = vsub.f32 %v314, %v666
    %v1019 = vsub.f32 %v315, %v667
    %v1020 = vsub.f32 %v316, %v668
    %v1021 = vsub.f32 %v317, %v669
    %v1022 = vsub.f32 %v318, %v670
    %v1023 = vsub.f32 %v319, %v671
    %v1024 = vsub.f32 %v320, %v672
    %v1025 = vsub.f32 %v321, %v673
    %v1026 = vsub.f32 %v322, %v674
    %v1027 = vsub.f32 %v323, %v675
    %v1028 = vsub.f32 %v324, %v676
    %v1029 = vsub.f32 %v325, %v677
    %v1030 = vsub.f32 %v326, %v678
    %v1031 = vsub.f32 %v327, %v679
    %v1032 = vsub.f32 %v328, %v680
    %v1033 = vsub.f32 %v329, %v681
    %v1034 = vsub.f32 %v330, %v682
    %v1035 = vsub.f32 %v331, %v683
    %v1036 = vsub.f32 %v332, %v684
    %v1037 = vsub.f32 %v333, %v685
    %v1038 = vsub.f32 %v334, %v686
    %v1039 = vsub.f32 %v335, %v687
    %v1040 = vsub.f32 %v336, %v688
    %v1041 = vsub.f32 %v337, %v689
    %v1042 = vsub.f32 %v338, %v690
    %v1043 = vsub.f32 %v339, %v691
    %v1044 = vsub.f32 %v340, %v692
    %v1045 = vsub.f32 %v341, %v693
    %v1046 = vsub.f32 %v342, %v694
    %v1047 = vsub.f32 %v343, %v695
    %v1048 = vsub.f32 %v344, %v696
    %v1049 = vsub.f32 %v345, %v697
    %v1050 = vsub.f32 %v346, %v698
    %v1051 = vsub.f32 %v347, %v699
    %v1052 = vsub.f32 %v348, %v700
    %v1053 = vsub.f32 %v349, %v701
    %v1054 = vsub.f32 %v350, %v702
    %v1055 = vsub.f32 %v351, %v703
    %v1056 = vsub.f32 %v352, %v704
    %v1057 = vsub.f32 %v353, %v705
    %v1058 = vsub.f32 %v354, %v706
    %v1059 = vsub.f32 %v355, %v707
    %v1060 = vsub.f32 %v356, %v708
    %v1061 = vsub.f32 %v357, %v709
    %v1062 = vsub.f32 %v358, %v710
    %v1063 = vsub.f32 %v359, %v711
    %v1064 = vsub.f32 %v360, %v712
    %v1065 = vsub.f32 %v361, %v713
    %v1066 = vsub.f32 %v362, %v714
    %v1067 = vsub.f32 %v363, %v715
    %v1068 = vsub.f32 %v364, %v716
    %v1069 = vsub.f32 %v365, %v717
    %v1070 = vsub.f32 %v366, %v718
    %v1071 = vsub.f32 %v367, %v719
    %v1072 = vsub.f32 %v368, %v720
    %v1073 = vsub.f32 %v369, %v721
    %v1074 = vsub.f32 %v370, %v722
    %v1075 = vsub.f32 %v371, %v723
    %v1076 = vsub.f32 %v372, %v724
    %v1077 = vsub.f32 %v373, %v725
    %v1078 = vsub.f32 %v374, %v726
    %v1079 = vsub.f32 %v375, %v727
    %v1080 = vsub.f32 %v376, %v728
    %v1081 = vsub.f32 %v377, %v729
    %v1082 = vsub.f32 %v378, %v730
    %v1083 = vsub.f32 %v379, %v731
    %v1084 = vsub.f32 %v380, %v732
    %v1085 = vsub.f32 %v381, %v733
    %v1086 = vsub.f32 %v382, %v734
    %v1087 = vsub.f32 %v383, %v735
    %v1088 = vsub.f32 %v384, %v736
    %v1089 = vsub.f32 %v385, %v737
    %v1090 = vsub.f32 %v386, %v738
    %v1091 = vsub.f32 %v387, %v739
    %v1092 = vsub.f32 %v388, %v740
    %v1093 = vsub.f32 %v389, %v741
    %v1094 = vsub.f32 %v390, %v742
    %v1095 = vsub.f32 %v391, %v743
    %v1096 = vsub.f32 %v392, %v744
    %v1097 = vsub.f32 %v393, %v745
    %v1098 = vsub.f32 %v394, %v746
    %v1099 = vsub.f32 %v395, %v747
    %v1100 = vsub.f32 %v396, %v748
    %v1101 = vsub.f32 %v397, %v749
    %v1102 = vsub.f32 %v398, %v750
    %v1103 = vsub.f32 %v399, %v751
    %v1104 = vsub.f32 %v400, %v752
    %v1105 = vsub.f32 %v401, %v753
    %v1106 = vsub.f32 %v402, %v754
    %v1107 = vsub.f32 %v403, %v755
    %v1108 = vsub.f32 %v404, %v756
    %v1109 = vsub.f32 %v405, %v757
    %v1110 = vsub.f32 %v406, %v758
    %v1111 = vsub.f32 %v407, %v759
    %v1112 = vsub.f32 %v408, %v760
    %v1113 = vsub.f32 %v409, %v761
    %v1114 = vsub.f32 %v410, %v762
    %v1115 = vsub.f32 %v411, %v763
    %v1116 = vsub.f32 %v412, %v764
    %v1117 = vsub.f32 %v413, %v765
    %v1118 = vsub.f32 %v414, %v766
    %v1119 = vsub.f32 %v415, %v767
    %v1120 = vsub.f32 %v416, %v768
    %v1121 = vsub.f32 %v417, %v769
    %v1122 = vld [vmem:[#allocation2] sm:$0xff]
    %v1123 = vld [vmem:[#allocation2 + $0x8] sm:$0xff]
    %v1124 = vld [vmem:[#allocation2 + $0x10] sm:$0xff]
    %v1125 = vld [vmem:[#allocation2 + $0x18] sm:$0xff]
    %v1126 = vadd.f32 %v770, %v774
    %v1127 = vadd.f32 %v1126, %v778
    %v1128 = vadd.f32 %v1127, %v782
    %v1129 = vadd.f32 %v1128, %v786
    %v1130 = vadd.f32 %v1129, %v790
    %v1131 = vadd.f32 %v1130, %v794
    %v1132 = vadd.f32 %v1131, %v798
    %v1133 = vadd.f32 %v1132, %v802
    %v1134 = vadd.f32 %v1133, %v806
    %v1135 = vadd.f32 %v1134, %v810
    %v1136 = vadd.f32 %v1135, %v814
    %v1137 = vadd.f32 %v1136, %v818
    %v1138 = vadd.f32 %v1137, %v822
    %v1139 = vadd.f32 %v1138, %v826
    %v1140 = vadd.f32 %v1139, %v830
    %v1141 = vadd.f32 %v1140, %v834
    %v1142 = vadd.f32 %v1141, %v838
    %v1143 = vadd.f32 %v1142, %v842
    %v1144 = vadd.f32 %v1143, %v846
    %v1145 = vadd.f32 %v1144, %v850
    %v1146 = vadd.f32 %v1145, %v854
    %v1147 = vadd.f32 %v1146, %v858
    %v1148 = vadd.f32 %v1147, %v862
    %v1149 = vadd.f32 %v1148, %v866
    %v1150 = vadd.f32 %v1149, %v870
    %v1151 = vadd.f32 %v1150, %v874
    %v1152 = vadd.f32 %v1151, %v878
    %v1153 = vadd.f32 %v1152, %v882
    %v1154 = vadd.f32 %v1153, %v886
    %v1155 = vadd.f32 %v1154, %v890
    %v1156 = vadd.f32 %v1155, %v894
    %v1157 = vadd.f32 %v1156, %v898
    %v1158 = vadd.f32 %v1157, %v902
    %v1159 = vadd.f32 %v1158, %v906
    %v1160 = vadd.f32 %v1159, %v910
    %v1161 = vadd.f32 %v1160, %v914
    %v1162 = vadd.f32 %v1161, %v918
    %v1163 = vadd.f32 %v1162, %v922
    %v1164 = vadd.f32 %v1163, %v926
    %v1165 = vadd.f32 %v1164, %v930
    %v1166 = vadd.f32 %v1165, %v934
    %v1167 = vadd.f32 %v1166, %v938
    %v1168 = vadd.f32 %v1167, %v942
    %v1169 = vadd.f32 %v1168, %v946
    %v1170 = vadd.f32 %v1169, %v950
    %v1171 = vadd.f32 %v1170, %v954
    %v1172 = vadd.f32 %v1171, %v958
    %v1173 = vadd.f32 %v1172, %v962
    %v1174 = vadd.f32 %v1173, %v966
    %v1175 = vadd.f32 %v1174, %v970
    %v1176 = vadd.f32 %v1175, %v974
    %v1177 = vadd.f32 %v1176, %v978
    %v1178 = vadd.f32 %v1177, %v982
    %v1179 = vadd.f32 %v1178, %v986
    %v1180 = vadd.f32 %v1179, %v990
    %v1181 = vadd.f32 %v1180, %v994
    %v1182 = vadd.f32 %v1181, %v998
    %v1183 = vadd.f32 %v1182, %v1002
    %v1184 = vadd.f32 %v1183, %v1006
    %v1185 = vadd.f32 %v1184, %v1010
    %v1186 = vadd.f32 %v1185, %v1014
    %v1187 = vadd.f32 %v1186, %v1018
    %v1188 = vadd.f32 %v1187, %v1022
    %v1189 = vadd.f32 %v1188, %v1026
    %v1190 = vadd.f32 %v1189, %v1030
    %v1191 = vadd.f32 %v1190, %v1034
    %v1192 = vadd.f32 %v1191, %v1038
    %v1193 = vadd.f32 %v1192, %v1042
    %v1194 = vadd.f32 %v1193, %v1046
    %v1195 = vadd.f32 %v1194, %v1050
    %v1196 = vadd.f32 %v1195, %v1054
    %v1197 = vadd.f32 %v1196, %v1058
    %v1198 = vadd.f32 %v1197, %v1062
    %v1199 = vadd.f32 %v1198, %v1066
    %v1200 = vadd.f32 %v1199, %v1070
    %v1201 = vadd.f32 %v1200, %v1074
    %v1202 = vadd.f32 %v1201, %v1078
    %v1203 = vadd.f32 %v1202, %v1082
    %v1204 = vadd.f32 %v1203, %v1086
    %v1205 = vadd.f32 %v1204, %v1090
    %v1206 = vadd.f32 %v1205, %v1094
    %v1207 = vadd.f32 %v1206, %v1098
    %v1208 = vadd.f32 %v1207, %v1102
    %v1209 = vadd.f32 %v1208, %v1106
    %v1210 = vadd.f32 %v1209, %v1110
    %v1211 = vadd.f32 %v1210, %v1114
    %v1212 = vadd.f32 %v1211, %v1118
    %v1213 = vadd.f32 %v771, %v775
    %v1214 = vadd.f32 %v1213, %v779
    %v1215 = vadd.f32 %v1214, %v783
    %v1216 = vadd.f32 %v1215, %v787
    %v1217 = vadd.f32 %v1216, %v791
    %v1218 = vadd.f32 %v1217, %v795
    %v1219 = vadd.f32 %v1218, %v799
    %v1220 = vadd.f32 %v1219, %v803
    %v1221 = vadd.f32 %v1220, %v807
    %v1222 = vadd.f32 %v1221, %v811
    %v1223 = vadd.f32 %v1222, %v815
    %v1224 = vadd.f32 %v1223, %v819
    %v1225 = vadd.f32 %v1224, %v823
    %v1226 = vadd.f32 %v1225, %v827
    %v1227 = vadd.f32 %v1226, %v831
    %v1228 = vadd.f32 %v1227, %v835
    %v1229 = vadd.f32 %v1228, %v839
    %v1230 = vadd.f32 %v1229, %v843
    %v1231 = vadd.f32 %v1230, %v847
    %v1232 = vadd.f32 %v1231, %v851
    %v1233 = vadd.f32 %v1232, %v855
    %v1234 = vadd.f32 %v1233, %v859
    %v1235 = vadd.f32 %v1234, %v863
    %v1236 = vadd.f32 %v1235, %v867
    %v1237 = vadd.f32 %v1236, %v871
    %v1238 = vadd.f32 %v1237, %v875
    %v1239 = vadd.f32 %v1238, %v879
    %v1240 = vadd.f32 %v1239, %v883
    %v1241 = vadd.f32 %v1240, %v887
    %v1242 = vadd.f32 %v1241, %v891
    %v1243 = vadd.f32 %v1242, %v895
    %v1244 = vadd.f32 %v1243, %v899
    %v1245 = vadd.f32 %v1244, %v903
    %v1246 = vadd.f32 %v1245, %v907
    %v1247 = vadd.f32 %v1246, %v911
    %v1248 = vadd.f32 %v1247, %v915
    %v1249 = vadd.f32 %v1248, %v919
    %v1250 = vadd.f32 %v1249, %v923
    %v1251 = vadd.f32 %v1250, %v927
    %v1252 = vadd.f32 %v1251, %v931
    %v1253 = vadd.f32 %v1252, %v935
    %v1254 = vadd.f32 %v1253, %v939
    %v1255 = vadd.f32 %v1254, %v943
    %v1256 = vadd.f32 %v1255, %v947
    %v1257 = vadd.f32 %v1256, %v951
    %v1258 = vadd.f32 %v1257, %v955
    %v1259 = vadd.f32 %v1258, %v959
    %v1260 = vadd.f32 %v1259, %v963
    %v1261 = vadd.f32 %v1260, %v967
    %v1262 = vadd.f32 %v1261, %v971
    %v1263 = vadd.f32 %v1262, %v975
    %v1264 = vadd.f32 %v1263, %v979
    %v1265 = vadd.f32 %v1264, %v983
    %v1266 = vadd.f32 %v1265, %v987
    %v1267 = vadd.f32 %v1266, %v991
    %v1268 = vadd.f32 %v1267, %v995
    %v1269 = vadd.f32 %v1268, %v999
    %v1270 = vadd.f32 %v1269, %v1003
    %v1271 = vadd.f32 %v1270, %v1007
    %v1272 = vadd.f32 %v1271, %v1011
    %v1273 = vadd.f32 %v1272, %v1015
    %v1274 = vadd.f32 %v1273, %v1019
    %v1275 = vadd.f32 %v1274, %v1023
    %v1276 = vadd.f32 %v1275, %v1027
    %v1277 = vadd.f32 %v1276, %v1031
    %v1278 = vadd.f32 %v1277, %v1035
    %v1279 = vadd.f32 %v1278, %v1039
    %v1280 = vadd.f32 %v1279, %v1043
    %v1281 = vadd.f32 %v1280, %v1047
    %v1282 = vadd.f32 %v1281, %v1051
    %v1283 = vadd.f32 %v1282, %v1055
    %v1284 = vadd.f32 %v1283, %v1059
    %v1285 = vadd.f32 %v1284, %v1063
    %v1286 = vadd.f32 %v1285, %v1067
    %v1287 = vadd.f32 %v1286, %v1071
    %v1288 = vadd.f32 %v1287, %v1075
    %v1289 = vadd.f32 %v1288, %v1079
    %v1290 = vadd.f32 %v1289, %v1083
    %v1291 = vadd.f32 %v1290, %v1087
    %v1292 = vadd.f32 %v1291, %v1091
    %v1293 = vadd.f32 %v1292, %v1095
    %v1294 = vadd.f32 %v1293, %v1099
    %v1295 = vadd.f32 %v1294, %v1103
    %v1296 = vadd.f32 %v1295, %v1107
    %v1297 = vadd.f32 %v1296, %v1111
    %v1298 = vadd.f32 %v1297, %v1115
    %v1299 = vadd.f32 %v1298, %v1119
    %v1300 = vadd.f32 %v772, %v776
    %v1301 = vadd.f32 %v1300, %v780
    %v1302 = vadd.f32 %v1301, %v784
    %v1303 = vadd.f32 %v1302, %v788
    %v1304 = vadd.f32 %v1303, %v792
    %v1305 = vadd.f32 %v1304, %v796
    %v1306 = vadd.f32 %v1305, %v800
    %v1307 = vadd.f32 %v1306, %v804
    %v1308 = vadd.f32 %v1307, %v808
    %v1309 = vadd.f32 %v1308, %v812
    %v1310 = vadd.f32 %v1309, %v816
    %v1311 = vadd.f32 %v1310, %v820
    %v1312 = vadd.f32 %v1311, %v824
    %v1313 = vadd.f32 %v1312, %v828
    %v1314 = vadd.f32 %v1313, %v832
    %v1315 = vadd.f32 %v1314, %v836
    %v1316 = vadd.f32 %v1315, %v840
    %v1317 = vadd.f32 %v1316, %v844
    %v1318 = vadd.f32 %v1317, %v848
    %v1319 = vadd.f32 %v1318, %v852
    %v1320 = vadd.f32 %v1319, %v856
    %v1321 = vadd.f32 %v1320, %v860
    %v1322 = vadd.f32 %v1321, %v864
    %v1323 = vadd.f32 %v1322, %v868
    %v1324 = vadd.f32 %v1323, %v872
    %v1325 = vadd.f32 %v1324, %v876
    %v1326 = vadd.f32 %v1325, %v880
    %v1327 = vadd.f32 %v1326, %v884
    %v1328 = vadd.f32 %v1327, %v888
    %v1329 = vadd.f32 %v1328, %v892
    %v1330 = vadd.f32 %v1329, %v896
    %v1331 = vadd.f32 %v1330, %v900
    %v1332 = vadd.f32 %v1331, %v904
    %v1333 = vadd.f32 %v1332, %v908
    %v1334 = vadd.f32 %v1333, %v912
    %v1335 = vadd.f32 %v1334, %v916
    %v1336 = vadd.f32 %v1335, %v920
    %v1337 = vadd.f32 %v1336, %v924
    %v1338 = vadd.f32 %v1337, %v928
    %v1339 = vadd.f32 %v1338, %v932
    %v1340 = vadd.f32 %v1339, %v936
    %v1341 = vadd.f32 %v1340, %v940
    %v1342 = vadd.f32 %v1341, %v944
    %v1343 = vadd.f32 %v1342, %v948
    %v1344 = vadd.f32 %v1343, %v952
    %v1345 = vadd.f32 %v1344, %v956
    %v1346 = vadd.f32 %v1345, %v960
    %v1347 = vadd.f32 %v1346, %v964
    %v1348 = vadd.f32 %v1347, %v968
    %v1349 = vadd.f32 %v1348, %v972
    %v1350 = vadd.f32 %v1349, %v976
    %v1351 = vadd.f32 %v1350, %v980
    %v1352 = vadd.f32 %v1351, %v984
    %v1353 = vadd.f32 %v1352, %v988
    %v1354 = vadd.f32 %v1353, %v992
    %v1355 = vadd.f32 %v1354, %v996
    %v1356 = vadd.f32 %v1355, %v1000
    %v1357 = vadd.f32 %v1356, %v1004
    %v1358 = vadd.f32 %v1357, %v1008
    %v1359 = vadd.f32 %v1358, %v1012
    %v1360 = vadd.f32 %v1359, %v1016
    %v1361 = vadd.f32 %v1360, %v1020
    %v1362 = vadd.f32 %v1361, %v1024
    %v1363 = vadd.f32 %v1362, %v1028
    %v1364 = vadd.f32 %v1363, %v1032
    %v1365 = vadd.f32 %v1364, %v1036
    %v1366 = vadd.f32 %v1365, %v1040
    %v1367 = vadd.f32 %v1366, %v1044
    %v1368 = vadd.f32 %v1367, %v1048
    %v1369 = vadd.f32 %v1368, %v1052
    %v1370 = vadd.f32 %v1369, %v1056
    %v1371 = vadd.f32 %v1370, %v1060
    %v1372 = vadd.f32 %v1371, %v1064
    %v1373 = vadd.f32 %v1372, %v1068
    %v1374 = vadd.f32 %v1373, %v1072
    %v1375 = vadd.f32 %v1374, %v1076
    %v1376 = vadd.f32 %v1375, %v1080
    %v1377 = vadd.f32 %v1376, %v1084
    %v1378 = vadd.f32 %v1377, %v1088
    %v1379 = vadd.f32 %v1378, %v1092
    %v1380 = vadd.f32 %v1379, %v1096
    %v1381 = vadd.f32 %v1380, %v1100
    %v1382 = vadd.f32 %v1381, %v1104
    %v1383 = vadd.f32 %v1382, %v1108
    %v1384 = vadd.f32 %v1383, %v1112
    %v1385 = vadd.f32 %v1384, %v1116
    %v1386 = vadd.f32 %v1385, %v1120
    %v1387 = vadd.f32 %v773, %v777
    %v1388 = vadd.f32 %v1387, %v781
    %v1389 = vadd.f32 %v1388, %v785
    %v1390 = vadd.f32 %v1389, %v789
    %v1391 = vadd.f32 %v1390, %v793
    %v1392 = vadd.f32 %v1391, %v797
    %v1393 = vadd.f32 %v1392, %v801
    %v1394 = vadd.f32 %v1393, %v805
    %v1395 = vadd.f32 %v1394, %v809
    %v1396 = vadd.f32 %v1395, %v813
    %v1397 = vadd.f32 %v1396, %v817
    %v1398 = vadd.f32 %v1397, %v821
    %v1399 = vadd.f32 %v1398, %v825
    %v1400 = vadd.f32 %v1399, %v829
    %v1401 = vadd.f32 %v1400, %v833
    %v1402 = vadd.f32 %v1401, %v837
    %v1403 = vadd.f32 %v1402, %v841
    %v1404 = vadd.f32 %v1403, %v845
    %v1405 = vadd.f32 %v1404, %v849
    %v1406 = vadd.f32 %v1405, %v853
    %v1407 = vadd.f32 %v1406, %v857
    %v1408 = vadd.f32 %v1407, %v861
    %v1409 = vadd.f32 %v1408, %v865
    %v1410 = vadd.f32 %v1409, %v869
    %v1411 = vadd.f32 %v1410, %v873
    %v1412 = vadd.f32 %v1411, %v877
    %v1413 = vadd.f32 %v1412, %v881
    %v1414 = vadd.f32 %v1413, %v885
    %v1415 = vadd.f32 %v1414, %v889
    %v1416 = vadd.f32 %v1415, %v893
    %v1417 = vadd.f32 %v1416, %v897
    %v1418 = vadd.f32 %v1417, %v901
    %v1419 = vadd.f32 %v1418, %v905
    %v1420 = vadd.f32 %v1419, %v909
    %v1421 = vadd.f32 %v1420, %v913
    %v1422 = vadd.f32 %v1421, %v917
    %v1423 = vadd.f32 %v1422, %v921
    %v1424 = vadd.f32 %v1423, %v925
    %v1425 = vadd.f32 %v1424, %v929
    %v1426 = vadd.f32 %v1425, %v933
    %v1427 = vadd.f32 %v1426, %v937
    %v1428 = vadd.f32 %v1427, %v941
    %v1429 = vadd.f32 %v1428, %v945
    %v1430 = vadd.f32 %v1429, %v949
    %v1431 = vadd.f32 %v1430, %v953
    %v1432 = vadd.f32 %v1431, %v957
    %v1433 = vadd.f32 %v1432, %v961
    %v1434 = vadd.f32 %v1433, %v965
    %v1435 = vadd.f32 %v1434, %v969
    %v1436 = vadd.f32 %v1435, %v973
    %v1437 = vadd.f32 %v1436, %v977
    %v1438 = vadd.f32 %v1437, %v981
    %v1439 = vadd.f32 %v1438, %v985
    %v1440 = vadd.f32 %v1439, %v989
    %v1441 = vadd.f32 %v1440, %v993
    %v1442 = vadd.f32 %v1441, %v997
    %v1443 = vadd.f32 %v1442, %v1001
    %v1444 = vadd.f32 %v1443, %v1005
    %v1445 = vadd.f32 %v1444, %v1009
    %v1446 = vadd.f32 %v1445, %v1013
    %v1447 = vadd.f32 %v1446, %v1017
    %v1448 = vadd.f32 %v1447, %v1021
    %v1449 = vadd.f32 %v1448, %v1025
    %v1450 = vadd.f32 %v1449, %v1029
    %v1451 = vadd.f32 %v1450, %v1033
    %v1452 = vadd.f32 %v1451, %v1037
    %v1453 = vadd.f32 %v1452, %v1041
    %v1454 = vadd.f32 %v1453, %v1045
    %v1455 = vadd.f32 %v1454, %v1049
    %v1456 = vadd.f32 %v1455, %v1053
    %v1457 = vadd.f32 %v1456, %v1057
    %v1458 = vadd.f32 %v1457, %v1061
    %v1459 = vadd.f32 %v1458, %v1065
    %v1460 = vadd.f32 %v1459, %v1069
    %v1461 = vadd.f32 %v1460, %v1073
    %v1462 = vadd.f32 %v1461, %v1077
    %v1463 = vadd.f32 %v1462, %v1081
    %v1464 = vadd.f32 %v1463, %v1085
    %v1465 = vadd.f32 %v1464, %v1089
    %v1466 = vadd.f32 %v1465, %v1093
    %v1467 = vadd.f32 %v1466, %v1097
    %v1468 = vadd.f32 %v1467, %v1101
    %v1469 = vadd.f32 %v1468, %v1105
    %v1470 = vadd.f32 %v1469, %v1109
    %v1471 = vadd.f32 %v1470, %v1113
    %v1472 = vadd.f32 %v1471, %v1117
    %v1473 = vadd.f32 %v1472, %v1121
    %v1474 = vadd.f32 %v1122, %v1212
    %v1475 = vadd.f32 %v1123, %v1299
    %v1476 = vadd.f32 %v1124, %v1386
    %v1477 = vadd.f32 %v1125, %v1473
    %1478 = vst [vmem:[#allocation2] sm:$0xff] %v1474
    %1479 = vst [vmem:[#allocation2 + $0x8] sm:$0xff] %v1475
    %1480 = vst [vmem:[#allocation2 + $0x10] sm:$0xff] %v1476
    %1481 = vst [vmem:[#allocation2 + $0x18] sm:$0xff] %v1477
    // Predicated region
    $region22: #{tpu_custom_call.1} parent=1 // pred_check
      %p1482 = pneg %p58
    $region23: #{tpu_custom_call.1} parent=1 // pred_check_branch
      %1484 = sbr.rel (%p1482) target = $region25
    $region24: #{tpu_custom_call.1} parent=1 // pred_region
      %v1485 = vld [vmem:[#allocation2] sm:$0xff]
      %v1486 = vld [vmem:[#allocation2 + $0x8] sm:$0xff]
      %v1487 = vld [vmem:[#allocation2 + $0x10] sm:$0xff]
      %v1488 = vld [vmem:[#allocation2 + $0x18] sm:$0xff]
      %1489 = vst [vmem:[#allocation8] sm:$0xff] %v1485
      %1490 = vst [vmem:[#allocation8 + $0x8] sm:$0xff] %v1486
      %1491 = vst [vmem:[#allocation8 + $0x10] sm:$0xff] %v1487
      %1492 = vst [vmem:[#allocation8 + $0x18] sm:$0xff] %v1488
    $region25: #{tpu_custom_call.1} parent=1 // pred_fallthru
      _
    // Predicated region
    $region26: #{tpu_custom_call.1} parent=1 // pred_check
      _
    $region27: #{tpu_custom_call.1} parent=1 // pred_check_branch
      %1494 = sbr.rel (0) target = $region29
    $region28: #{tpu_custom_call.1} parent=1 // pred_region
      %1496 = vsyncadd [#allocation5], 0
      %s1498 = sshll.u32 [#allocation8], 4
      %s1499 = int_to_ptr.vmem [resolvable:$true] %s1498
      %s1500 = sshll.u32 %s2, 4
      %s1501 = int_to_ptr.hbm [resolvable:$true] %s1500
      %1503 = dma.vmem_to_hbm [thread:$0]  %s1499, 512, %s1501, [#allocation5]
    $region29: #{tpu_custom_call.1} parent=1 // pred_fallthru
      _
    // Predicated region
    $region30: #{tpu_custom_call.1} parent=1 // pred_check
      _
    $region31: #{tpu_custom_call.1} parent=1 // pred_check_branch
      %1505 = sbr.rel (0) target = $region33
    $region32: #{tpu_custom_call.1} parent=1 // pred_region
      %1507 = dma.done [#allocation5], 512
    $region33: #{tpu_custom_call.1} parent=1 // pred_fallthru
      _
    %1508 = vsyncpa [#allocation4], 1
    %1509 = vsyncpa [#allocation7], 1
    %1510 = vsyncpa [#allocation5], 1

</llo_original>
